<compile_context>
chip_gen: v5e
topology: v5e:2x2
jax: 0.10.0
libtpu: 0.0.40
codegen_flags: <defaults>
</compile_context>

<pallas_src>
import functools

import jax
import jax.numpy as jnp
import numpy as np
from jax.experimental import pallas as pl
from jax.experimental.pallas import tpu as pltpu


def _pred_head_kernel(x_ref, w1_ref, b1_ref, w2_ref, b2_ref, o_ref,
                      xf_ref, hf_ref, *, H, W):
    """Fused conv3x3 -> ReLU -> conv3x3 for one batch element.

    x_ref : (1, Cin, H, W)     NCHW input tile
    w1_ref: (hidden, 9*Cin)    conv1 weights, columns ordered (ky, kx, cin)
    b1_ref: (hidden, 1)
    w2_ref: (Cout, 9*hidden)   conv2 weights, columns ordered (ky, kx, c)
    b2_ref: (Cout, 1)
    o_ref : (1, Cout, H*W)     flattened-NCHW output tile (lane-dense)
    xf_ref: (Cin, L)    VMEM scratch: zero-padded conv1 input, padded rows of
                        the (H+2, W+2) image flattened with stride S = W+2
    hf_ref: (hidden, L) VMEM scratch: same layout for the conv2 input
    """
    S = W + 2                 # padded row stride
    TAP = H * S               # over-computed output columns per image

    # ---- build the zero-padded, row-flattened conv1 input in VMEM ----------
    xf_ref[...] = jnp.zeros_like(xf_ref)
    hf_ref[...] = jnp.zeros_like(hf_ref)
    xin = x_ref[0]                                      # (Cin, H, W)
    for y in range(H):
        base = (y + 1) * S + 1                          # interior of padded row y+1
        xf_ref[:, base:base + W] = xin[:, y, :]

    # ---- conv1: one im2col matmul on the MXU -------------------------------
    xf = xf_ref[...]
    p1 = jnp.concatenate(
        [xf[:, ky * S + kx: ky * S + kx + TAP]
         for ky in range(3) for kx in range(3)], axis=0)          # (9*Cin, TAP)
    h = jnp.dot(w1_ref[...], p1, preferred_element_type=jnp.float32)
    h = jnp.maximum(h + b1_ref[...], 0.0)                         # (hidden, TAP)

    # Wrap-around columns (x in {W, W+1}) are garbage; they land exactly on the
    # left/right zero-padding slots of the conv2 input, so mask them to zero
    # and place the whole block with a single shifted store.
    col = jax.lax.broadcasted_iota(jnp.int32, (1, TAP), 1)
    h = jnp.where(col % S < W, h, 0.0)
    hf_ref[:, S + 1:S + 1 + TAP] = h

    # ---- conv2: one im2col matmul on the MXU -------------------------------
    hf = hf_ref[...]
    p2 = jnp.concatenate(
        [hf[:, ky * S + kx: ky * S + kx + TAP]
         for ky in range(3) for kx in range(3)], axis=0)          # (9*hidden, TAP)
    out = jnp.dot(w2_ref[...], p2, preferred_element_type=jnp.float32)
    out = out + b2_ref[...]                                       # (Cout, TAP)

    # ---- compact stride-S columns into dense flattened-NCHW (Cout, H*W) ----
    for y in range(H):
        o_ref[0, :, y * W:(y + 1) * W] = (
            out[:, y * S:y * S + W].astype(o_ref.dtype))


@jax.jit
def pred_head_forward(x_nchw, params):
    """PredHead forward: conv3x3 -> ReLU -> conv3x3.  NCHW in / NCHW out."""
    N, Cin, H, W = x_nchw.shape
    w1, b1, w2, b2 = params["w1"], params["b1"], params["w2"], params["b2"]
    hidden = w1.shape[0]
    cout = w2.shape[0]
    S = W + 2
    L = H * S + 2 * S + 2          # padded-flat buffer length (covers max tap)

    # Weights -> im2col matmul form; columns ordered (ky, kx, cin).
    w1m = jnp.transpose(w1, (0, 2, 3, 1)).reshape(hidden, 9 * Cin)
    w2m = jnp.transpose(w2, (0, 2, 3, 1)).reshape(cout, 9 * hidden)
    b1c = b1.reshape(hidden, 1)
    b2c = b2.reshape(cout, 1)

    kernel = functools.partial(_pred_head_kernel, H=H, W=W)
    out_flat = pl.pallas_call(
        kernel,
        out_shape=jax.ShapeDtypeStruct((N, cout, H * W), x_nchw.dtype),
        grid_spec=pltpu.PrefetchScalarGridSpec(
            num_scalar_prefetch=0,
            grid=(N,),
            in_specs=[
                pl.BlockSpec((1, Cin, H, W), lambda n: (n, 0, 0, 0)),
                pl.BlockSpec((hidden, 9 * Cin), lambda n: (0, 0)),
                pl.BlockSpec((hidden, 1), lambda n: (0, 0)),
                pl.BlockSpec((cout, 9 * hidden), lambda n: (0, 0)),
                pl.BlockSpec((cout, 1), lambda n: (0, 0)),
            ],
            out_specs=pl.BlockSpec((1, cout, H * W), lambda n: (n, 0, 0)),
            scratch_shapes=[
                pltpu.VMEM((Cin, L), jnp.float32),
                pltpu.VMEM((hidden, L), jnp.float32),
            ],
        ),
        compiler_params=pltpu.CompilerParams(
            dimension_semantics=("parallel",)),
    )(x_nchw, w1m, b1c, w2m, b2c)
    # Metadata-only reshape: the flat output is already NCHW-ordered.
    return out_flat.reshape(N, cout, H, W)


def init_params(key, input_dim, hidden_dim):
    k1, k2, k3, k4 = jax.random.split(key, 4)
    # Deterministic synthetic init, PyTorch OIHW weight layout.
    w1 = jax.random.normal(k1, (hidden_dim, input_dim, 3, 3), jnp.float32) * 0.05
    b1 = jax.random.normal(k2, (hidden_dim,), jnp.float32) * 0.05
    w2 = jax.random.normal(k3, (3, hidden_dim, 3, 3), jnp.float32) * 0.05
    b2 = jax.random.normal(k4, (3,), jnp.float32) * 0.05
    return {"w1": w1, "b1": b1, "w2": w2, "b2": b2}


def _reference_forward(x_nchw, params):
    """Plain-JAX reference (lax conv, NCHW/OIHW) for validation."""
    dn = jax.lax.conv_dimension_numbers(x_nchw.shape, params["w1"].shape,
                                        ("NCHW", "OIHW", "NCHW"))
    h = jax.lax.conv_general_dilated(x_nchw, params["w1"], (1, 1), "SAME",
                                     dimension_numbers=dn)
    h = jnp.maximum(h + params["b1"][None, :, None, None], 0.0)
    dn2 = jax.lax.conv_dimension_numbers(h.shape, params["w2"].shape,
                                         ("NCHW", "OIHW", "NCHW"))
    y = jax.lax.conv_general_dilated(h, params["w2"], (1, 1), "SAME",
                                     dimension_numbers=dn2)
    return y + params["b2"][None, :, None, None]


if __name__ == "__main__":
    # Small shapes consistent with the module's forward (NCHW input).
    batch, input_dim, hidden_dim, H, W = 2, 8, 32, 16, 16

    key = jax.random.PRNGKey(0)
    kx, kp = jax.random.split(key)
    x = jax.random.normal(kx, (batch, input_dim, H, W), jnp.float32)
    params = init_params(kp, input_dim, hidden_dim)

    out = jax.block_until_ready(pred_head_forward(x, params))
    ref = jax.block_until_ready(_reference_forward(x, params))

    assert out.shape == (batch, 3, H, W)
    assert np.allclose(np.asarray(out), np.asarray(ref), rtol=1e-4, atol=1e-4)

    print("KERNEL_OK")
</pallas_src>

<mosaic_0001>
module attributes {stable_mosaic.version = 11 : i64} {
  func.func @_pred_head_kernel(%arg0: i32, %arg1: memref<1x8x16x16xf32, #tpu.memory_space<vmem>>, %arg2: memref<32x72xf32, #tpu.memory_space<vmem>>, %arg3: memref<32x1xf32, #tpu.memory_space<vmem>>, %arg4: memref<3x288xf32, #tpu.memory_space<vmem>>, %arg5: memref<3x1xf32, #tpu.memory_space<vmem>>, %arg6: memref<1x3x256xf32, #tpu.memory_space<vmem>>, %arg7: memref<8x326xf32, #tpu.memory_space<vmem>>, %arg8: memref<32x326xf32, #tpu.memory_space<vmem>>) attributes {dimension_semantics = [#tpu.dimension_semantics<parallel>], iteration_bounds = array<i64: 2>, scalar_prefetch = 0 : i64, scratch_operands = 2 : i64, tpu.core_type = #tpu.core_type<tc>, window_params = [{transform_indices = @transform_0, window_bounds = array<i64: 1, 8, 16, 16>}, {pipeline_mode = #tpu.pipeline_mode<synchronous>, transform_indices = @transform_1, window_bounds = array<i64: 32, 72>}, {pipeline_mode = #tpu.pipeline_mode<synchronous>, transform_indices = @transform_2, window_bounds = array<i64: 32, 1>}, {pipeline_mode = #tpu.pipeline_mode<synchronous>, transform_indices = @transform_3, window_bounds = array<i64: 3, 288>}, {pipeline_mode = #tpu.pipeline_mode<synchronous>, transform_indices = @transform_4, window_bounds = array<i64: 3, 1>}, {transform_indices = @transform_5, window_bounds = array<i64: 1, 3, 256>}]} {
    %cst = arith.constant 0.000000e+00 : f32
    %0 = vector.broadcast %cst : f32 to vector<8x326xf32>
    %c0 = arith.constant 0 : index
    %c0_0 = arith.constant 0 : index
    %1 = vector.load %arg7[%c0, %c0_0] : memref<8x326xf32, #tpu.memory_space<vmem>>, vector<8x326xf32>
    tpu.vector_store %arg7[%c0, %c0_0], %0 {strides = array<i32>} : memref<8x326xf32, #tpu.memory_space<vmem>>, vector<8x326xf32>,
    %cst_1 = arith.constant 0.000000e+00 : f32
    %2 = vector.broadcast %cst_1 : f32 to vector<32x326xf32>
    %c0_2 = arith.constant 0 : index
    %c0_3 = arith.constant 0 : index
    %3 = vector.load %arg8[%c0_2, %c0_3] : memref<32x326xf32, #tpu.memory_space<vmem>>, vector<32x326xf32>
    tpu.vector_store %arg8[%c0_2, %c0_3], %2 {strides = array<i32>} : memref<32x326xf32, #tpu.memory_space<vmem>>, vector<32x326xf32>,
    %c0_4 = arith.constant 0 : index
    %c0_5 = arith.constant 0 : index
    %c0_6 = arith.constant 0 : index
    %c0_7 = arith.constant 0 : index
    %4 = vector.load %arg1[%c0_4, %c0_5, %c0_6, %c0_7] : memref<1x8x16x16xf32, #tpu.memory_space<vmem>>, vector<1x8x16x16xf32>
    %5 = vector.shape_cast %4 : vector<1x8x16x16xf32> to vector<8x16x16xf32>
    %6 = vector.extract_strided_slice %5 {offsets = [0, 0, 0], sizes = [8, 1, 16], strides = [1, 1, 1]} : vector<8x16x16xf32> to vector<8x1x16xf32>
    %7 = vector.shape_cast %6 : vector<8x1x16xf32> to vector<8x16xf32>
    %c0_8 = arith.constant 0 : index
    %c19 = arith.constant 19 : index
    %8 = vector.load %arg7[%c0_8, %c19] : memref<8x326xf32, #tpu.memory_space<vmem>>, vector<8x16xf32>
    tpu.vector_store %arg7[%c0_8, %c19], %7 {strides = array<i32>} : memref<8x326xf32, #tpu.memory_space<vmem>>, vector<8x16xf32>,
    %9 = vector.extract_strided_slice %5 {offsets = [0, 1, 0], sizes = [8, 1, 16], strides = [1, 1, 1]} : vector<8x16x16xf32> to vector<8x1x16xf32>
    %10 = vector.shape_cast %9 : vector<8x1x16xf32> to vector<8x16xf32>
    %c0_9 = arith.constant 0 : index
    %c37 = arith.constant 37 : index
    %11 = vector.load %arg7[%c0_9, %c37] : memref<8x326xf32, #tpu.memory_space<vmem>>, vector<8x16xf32>
    tpu.vector_store %arg7[%c0_9, %c37], %10 {strides = array<i32>} : memref<8x326xf32, #tpu.memory_space<vmem>>, vector<8x16xf32>,
    %12 = vector.extract_strided_slice %5 {offsets = [0, 2, 0], sizes = [8, 1, 16], strides = [1, 1, 1]} : vector<8x16x16xf32> to vector<8x1x16xf32>
    %13 = vector.shape_cast %12 : vector<8x1x16xf32> to vector<8x16xf32>
    %c0_10 = arith.constant 0 : index
    %c55 = arith.constant 55 : index
    %14 = vector.load %arg7[%c0_10, %c55] : memref<8x326xf32, #tpu.memory_space<vmem>>, vector<8x16xf32>
    tpu.vector_store %arg7[%c0_10, %c55], %13 {strides = array<i32>} : memref<8x326xf32, #tpu.memory_space<vmem>>, vector<8x16xf32>,
    %15 = vector.extract_strided_slice %5 {offsets = [0, 3, 0], sizes = [8, 1, 16], strides = [1, 1, 1]} : vector<8x16x16xf32> to vector<8x1x16xf32>
    %16 = vector.shape_cast %15 : vector<8x1x16xf32> to vector<8x16xf32>
    %c0_11 = arith.constant 0 : index
    %c73 = arith.constant 73 : index
    %17 = vector.load %arg7[%c0_11, %c73] : memref<8x326xf32, #tpu.memory_space<vmem>>, vector<8x16xf32>
    tpu.vector_store %arg7[%c0_11, %c73], %16 {strides = array<i32>} : memref<8x326xf32, #tpu.memory_space<vmem>>, vector<8x16xf32>,
    %18 = vector.extract_strided_slice %5 {offsets = [0, 4, 0], sizes = [8, 1, 16], strides = [1, 1, 1]} : vector<8x16x16xf32> to vector<8x1x16xf32>
    %19 = vector.shape_cast %18 : vector<8x1x16xf32> to vector<8x16xf32>
    %c0_12 = arith.constant 0 : index
    %c91 = arith.constant 91 : index
    %20 = vector.load %arg7[%c0_12, %c91] : memref<8x326xf32, #tpu.memory_space<vmem>>, vector<8x16xf32>
    tpu.vector_store %arg7[%c0_12, %c91], %19 {strides = array<i32>} : memref<8x326xf32, #tpu.memory_space<vmem>>, vector<8x16xf32>,
    %21 = vector.extract_strided_slice %5 {offsets = [0, 5, 0], sizes = [8, 1, 16], strides = [1, 1, 1]} : vector<8x16x16xf32> to vector<8x1x16xf32>
    %22 = vector.shape_cast %21 : vector<8x1x16xf32> to vector<8x16xf32>
    %c0_13 = arith.constant 0 : index
    %c109 = arith.constant 109 : index
    %23 = vector.load %arg7[%c0_13, %c109] : memref<8x326xf32, #tpu.memory_space<vmem>>, vector<8x16xf32>
    tpu.vector_store %arg7[%c0_13, %c109], %22 {strides = array<i32>} : memref<8x326xf32, #tpu.memory_space<vmem>>, vector<8x16xf32>,
    %24 = vector.extract_strided_slice %5 {offsets = [0, 6, 0], sizes = [8, 1, 16], strides = [1, 1, 1]} : vector<8x16x16xf32> to vector<8x1x16xf32>
    %25 = vector.shape_cast %24 : vector<8x1x16xf32> to vector<8x16xf32>
    %c0_14 = arith.constant 0 : index
    %c127 = arith.constant 127 : index
    %26 = vector.load %arg7[%c0_14, %c127] : memref<8x326xf32, #tpu.memory_space<vmem>>, vector<8x16xf32>
    tpu.vector_store %arg7[%c0_14, %c127], %25 {strides = array<i32>} : memref<8x326xf32, #tpu.memory_space<vmem>>, vector<8x16xf32>,
    %27 = vector.extract_strided_slice %5 {offsets = [0, 7, 0], sizes = [8, 1, 16], strides = [1, 1, 1]} : vector<8x16x16xf32> to vector<8x1x16xf32>
    %28 = vector.shape_cast %27 : vector<8x1x16xf32> to vector<8x16xf32>
    %c0_15 = arith.constant 0 : index
    %c145 = arith.constant 145 : index
    %29 = vector.load %arg7[%c0_15, %c145] : memref<8x326xf32, #tpu.memory_space<vmem>>, vector<8x16xf32>
    tpu.vector_store %arg7[%c0_15, %c145], %28 {strides = array<i32>} : memref<8x326xf32, #tpu.memory_space<vmem>>, vector<8x16xf32>,
    %30 = vector.extract_strided_slice %5 {offsets = [0, 8, 0], sizes = [8, 1, 16], strides = [1, 1, 1]} : vector<8x16x16xf32> to vector<8x1x16xf32>
    %31 = vector.shape_cast %30 : vector<8x1x16xf32> to vector<8x16xf32>
    %c0_16 = arith.constant 0 : index
    %c163 = arith.constant 163 : index
    %32 = vector.load %arg7[%c0_16, %c163] : memref<8x326xf32, #tpu.memory_space<vmem>>, vector<8x16xf32>
    tpu.vector_store %arg7[%c0_16, %c163], %31 {strides = array<i32>} : memref<8x326xf32, #tpu.memory_space<vmem>>, vector<8x16xf32>,
    %33 = vector.extract_strided_slice %5 {offsets = [0, 9, 0], sizes = [8, 1, 16], strides = [1, 1, 1]} : vector<8x16x16xf32> to vector<8x1x16xf32>
    %34 = vector.shape_cast %33 : vector<8x1x16xf32> to vector<8x16xf32>
    %c0_17 = arith.constant 0 : index
    %c181 = arith.constant 181 : index
    %35 = vector.load %arg7[%c0_17, %c181] : memref<8x326xf32, #tpu.memory_space<vmem>>, vector<8x16xf32>
    tpu.vector_store %arg7[%c0_17, %c181], %34 {strides = array<i32>} : memref<8x326xf32, #tpu.memory_space<vmem>>, vector<8x16xf32>,
    %36 = vector.extract_strided_slice %5 {offsets = [0, 10, 0], sizes = [8, 1, 16], strides = [1, 1, 1]} : vector<8x16x16xf32> to vector<8x1x16xf32>
    %37 = vector.shape_cast %36 : vector<8x1x16xf32> to vector<8x16xf32>
    %c0_18 = arith.constant 0 : index
    %c199 = arith.constant 199 : index
    %38 = vector.load %arg7[%c0_18, %c199] : memref<8x326xf32, #tpu.memory_space<vmem>>, vector<8x16xf32>
    tpu.vector_store %arg7[%c0_18, %c199], %37 {strides = array<i32>} : memref<8x326xf32, #tpu.memory_space<vmem>>, vector<8x16xf32>,
    %39 = vector.extract_strided_slice %5 {offsets = [0, 11, 0], sizes = [8, 1, 16], strides = [1, 1, 1]} : vector<8x16x16xf32> to vector<8x1x16xf32>
    %40 = vector.shape_cast %39 : vector<8x1x16xf32> to vector<8x16xf32>
    %c0_19 = arith.constant 0 : index
    %c217 = arith.constant 217 : index
    %41 = vector.load %arg7[%c0_19, %c217] : memref<8x326xf32, #tpu.memory_space<vmem>>, vector<8x16xf32>
    tpu.vector_store %arg7[%c0_19, %c217], %40 {strides = array<i32>} : memref<8x326xf32, #tpu.memory_space<vmem>>, vector<8x16xf32>,
    %42 = vector.extract_strided_slice %5 {offsets = [0, 12, 0], sizes = [8, 1, 16], strides = [1, 1, 1]} : vector<8x16x16xf32> to vector<8x1x16xf32>
    %43 = vector.shape_cast %42 : vector<8x1x16xf32> to vector<8x16xf32>
    %c0_20 = arith.constant 0 : index
    %c235 = arith.constant 235 : index
    %44 = vector.load %arg7[%c0_20, %c235] : memref<8x326xf32, #tpu.memory_space<vmem>>, vector<8x16xf32>
    tpu.vector_store %arg7[%c0_20, %c235], %43 {strides = array<i32>} : memref<8x326xf32, #tpu.memory_space<vmem>>, vector<8x16xf32>,
    %45 = vector.extract_strided_slice %5 {offsets = [0, 13, 0], sizes = [8, 1, 16], strides = [1, 1, 1]} : vector<8x16x16xf32> to vector<8x1x16xf32>
    %46 = vector.shape_cast %45 : vector<8x1x16xf32> to vector<8x16xf32>
    %c0_21 = arith.constant 0 : index
    %c253 = arith.constant 253 : index
    %47 = vector.load %arg7[%c0_21, %c253] : memref<8x326xf32, #tpu.memory_space<vmem>>, vector<8x16xf32>
    tpu.vector_store %arg7[%c0_21, %c253], %46 {strides = array<i32>} : memref<8x326xf32, #tpu.memory_space<vmem>>, vector<8x16xf32>,
    %48 = vector.extract_strided_slice %5 {offsets = [0, 14, 0], sizes = [8, 1, 16], strides = [1, 1, 1]} : vector<8x16x16xf32> to vector<8x1x16xf32>
    %49 = vector.shape_cast %48 : vector<8x1x16xf32> to vector<8x16xf32>
    %c0_22 = arith.constant 0 : index
    %c271 = arith.constant 271 : index
    %50 = vector.load %arg7[%c0_22, %c271] : memref<8x326xf32, #tpu.memory_space<vmem>>, vector<8x16xf32>
    tpu.vector_store %arg7[%c0_22, %c271], %49 {strides = array<i32>} : memref<8x326xf32, #tpu.memory_space<vmem>>, vector<8x16xf32>,
    %51 = vector.extract_strided_slice %5 {offsets = [0, 15, 0], sizes = [8, 1, 16], strides = [1, 1, 1]} : vector<8x16x16xf32> to vector<8x1x16xf32>
    %52 = vector.shape_cast %51 : vector<8x1x16xf32> to vector<8x16xf32>
    %c0_23 = arith.constant 0 : index
    %c289 = arith.constant 289 : index
    %53 = vector.load %arg7[%c0_23, %c289] : memref<8x326xf32, #tpu.memory_space<vmem>>, vector<8x16xf32>
    tpu.vector_store %arg7[%c0_23, %c289], %52 {strides = array<i32>} : memref<8x326xf32, #tpu.memory_space<vmem>>, vector<8x16xf32>,
    %c0_24 = arith.constant 0 : index
    %c0_25 = arith.constant 0 : index
    %54 = vector.load %arg7[%c0_24, %c0_25] : memref<8x326xf32, #tpu.memory_space<vmem>>, vector<8x326xf32>
    %55 = vector.extract_strided_slice %54 {offsets = [0, 0], sizes = [8, 288], strides = [1, 1]} : vector<8x326xf32> to vector<8x288xf32>
    %56 = vector.extract_strided_slice %54 {offsets = [0, 1], sizes = [8, 288], strides = [1, 1]} : vector<8x326xf32> to vector<8x288xf32>
    %57 = vector.extract_strided_slice %54 {offsets = [0, 2], sizes = [8, 288], strides = [1, 1]} : vector<8x326xf32> to vector<8x288xf32>
    %58 = vector.extract_strided_slice %54 {offsets = [0, 18], sizes = [8, 288], strides = [1, 1]} : vector<8x326xf32> to vector<8x288xf32>
    %59 = vector.extract_strided_slice %54 {offsets = [0, 19], sizes = [8, 288], strides = [1, 1]} : vector<8x326xf32> to vector<8x288xf32>
    %60 = vector.extract_strided_slice %54 {offsets = [0, 20], sizes = [8, 288], strides = [1, 1]} : vector<8x326xf32> to vector<8x288xf32>
    %61 = vector.extract_strided_slice %54 {offsets = [0, 36], sizes = [8, 288], strides = [1, 1]} : vector<8x326xf32> to vector<8x288xf32>
    %62 = vector.extract_strided_slice %54 {offsets = [0, 37], sizes = [8, 288], strides = [1, 1]} : vector<8x326xf32> to vector<8x288xf32>
    %63 = vector.extract_strided_slice %54 {offsets = [0, 38], sizes = [8, 288], strides = [1, 1]} : vector<8x326xf32> to vector<8x288xf32>
    %64 = tpu.concatenate %55, %56, %57, %58, %59, %60, %61, %62, %63 in 0 : vector<8x288xf32>, vector<8x288xf32>, vector<8x288xf32>, vector<8x288xf32>, vector<8x288xf32>, vector<8x288xf32>, vector<8x288xf32>, vector<8x288xf32>, vector<8x288xf32> -> vector<72x288xf32>
    %c0_26 = arith.constant 0 : index
    %c0_27 = arith.constant 0 : index
    %65 = vector.load %arg2[%c0_26, %c0_27] : memref<32x72xf32, #tpu.memory_space<vmem>>, vector<32x72xf32>
    %cst_28 = arith.constant dense<0.000000e+00> : vector<32x288xf32>
    %66 = tpu.matmul %65, %64, %cst_28 {dimension_numbers = #tpu.dot_dimension_numbers<[1], [0], [0], [1], [0, 0, 1, 1], [], []>} : vector<32x72xf32>, vector<72x288xf32>, vector<32x288xf32> -> vector<32x288xf32>
    %c0_29 = arith.constant 0 : index
    %c0_30 = arith.constant 0 : index
    %67 = vector.load %arg3[%c0_29, %c0_30] : memref<32x1xf32, #tpu.memory_space<vmem>>, vector<32x1xf32>
    %68 = vector.broadcast %67 : vector<32x1xf32> to vector<32x288xf32>
    %69 = arith.addf %66, %68 : vector<32x288xf32>
    %cst_31 = arith.constant 0.000000e+00 : f32
    %70 = vector.broadcast %cst_31 : f32 to vector<32x288xf32>
    %71 = arith.maximumf %69, %70 : vector<32x288xf32>
    %72 = tpu.iota {dimensions = array<i32: 1>} : vector<1x288xi32>
    %c18_i32 = arith.constant 18 : i32
    %c0_i32 = arith.constant 0 : i32
    %73 = arith.cmpi eq, %c18_i32, %c0_i32 : i32
    %c1_i32 = arith.constant 1 : i32
    %74 = arith.select %73, %c1_i32, %c18_i32 : i32
    %75 = vector.broadcast %74 : i32 to vector<1x288xi32>
    %76 = arith.remsi %72, %75 : vector<1x288xi32>
    %c0_i32_32 = arith.constant 0 : i32
    %77 = vector.broadcast %c0_i32_32 : i32 to vector<1x288xi32>
    %78 = arith.cmpi ne, %76, %77 : vector<1x288xi32>
    %c0_i32_33 = arith.constant 0 : i32
    %79 = vector.broadcast %c0_i32_33 : i32 to vector<1x288xi32>
    %80 = arith.cmpi slt, %76, %79 : vector<1x288xi32>
    %c0_i32_34 = arith.constant 0 : i32
    %81 = arith.cmpi slt, %74, %c0_i32_34 : i32
    %82 = vector.broadcast %81 : i1 to vector<1x288xi1>
    %83 = vector.broadcast %82 : vector<1x288xi1> to vector<1x288xi1>
    %84 = arith.xori %80, %83 : vector<1x288xi1>
    %85 = arith.andi %84, %78 : vector<1x288xi1>
    %86 = vector.broadcast %74 : i32 to vector<1x288xi32>
    %87 = arith.addi %76, %86 : vector<1x288xi32>
    %88 = arith.select %85, %87, %76 : vector<1x288xi1>, vector<1x288xi32>
    %c16_i32 = arith.constant 16 : i32
    %89 = vector.broadcast %c16_i32 : i32 to vector<1x288xi32>
    %90 = arith.cmpi slt, %88, %89 : vector<1x288xi32>
    %cst_35 = arith.constant 0.000000e+00 : f32
    %91 = vector.shape_cast %90 : vector<1x288xi1> to vector<1x288xi1>
    %92 = vector.broadcast %91 : vector<1x288xi1> to vector<32x288xi1>
    %93 = vector.broadcast %cst_35 : f32 to vector<32x288xf32>
    %94 = arith.select %92, %71, %93 : vector<32x288xi1>, vector<32x288xf32>
    %c0_36 = arith.constant 0 : index
    %c19_37 = arith.constant 19 : index
    %95 = vector.load %arg8[%c0_36, %c19_37] : memref<32x326xf32, #tpu.memory_space<vmem>>, vector<32x288xf32>
    tpu.vector_store %arg8[%c0_36, %c19_37], %94 {strides = array<i32>} : memref<32x326xf32, #tpu.memory_space<vmem>>, vector<32x288xf32>,
    %c0_38 = arith.constant 0 : index
    %c0_39 = arith.constant 0 : index
    %96 = vector.load %arg8[%c0_38, %c0_39] : memref<32x326xf32, #tpu.memory_space<vmem>>, vector<32x326xf32>
    %97 = vector.extract_strided_slice %96 {offsets = [0, 0], sizes = [32, 288], strides = [1, 1]} : vector<32x326xf32> to vector<32x288xf32>
    %98 = vector.extract_strided_slice %96 {offsets = [0, 1], sizes = [32, 288], strides = [1, 1]} : vector<32x326xf32> to vector<32x288xf32>
    %99 = vector.extract_strided_slice %96 {offsets = [0, 2], sizes = [32, 288], strides = [1, 1]} : vector<32x326xf32> to vector<32x288xf32>
    %100 = vector.extract_strided_slice %96 {offsets = [0, 18], sizes = [32, 288], strides = [1, 1]} : vector<32x326xf32> to vector<32x288xf32>
    %101 = vector.extract_strided_slice %96 {offsets = [0, 19], sizes = [32, 288], strides = [1, 1]} : vector<32x326xf32> to vector<32x288xf32>
    %102 = vector.extract_strided_slice %96 {offsets = [0, 20], sizes = [32, 288], strides = [1, 1]} : vector<32x326xf32> to vector<32x288xf32>
    %103 = vector.extract_strided_slice %96 {offsets = [0, 36], sizes = [32, 288], strides = [1, 1]} : vector<32x326xf32> to vector<32x288xf32>
    %104 = vector.extract_strided_slice %96 {offsets = [0, 37], sizes = [32, 288], strides = [1, 1]} : vector<32x326xf32> to vector<32x288xf32>
    %105 = vector.extract_strided_slice %96 {offsets = [0, 38], sizes = [32, 288], strides = [1, 1]} : vector<32x326xf32> to vector<32x288xf32>
    %106 = tpu.concatenate %97, %98, %99, %100, %101, %102, %103, %104, %105 in 0 : vector<32x288xf32>, vector<32x288xf32>, vector<32x288xf32>, vector<32x288xf32>, vector<32x288xf32>, vector<32x288xf32>, vector<32x288xf32>, vector<32x288xf32>, vector<32x288xf32> -> vector<288x288xf32>
    %c0_40 = arith.constant 0 : index
    %c0_41 = arith.constant 0 : index
    %107 = vector.load %arg4[%c0_40, %c0_41] : memref<3x288xf32, #tpu.memory_space<vmem>>, vector<3x288xf32>
    %cst_42 = arith.constant dense<0.000000e+00> : vector<3x288xf32>
    %108 = tpu.matmul %107, %106, %cst_42 {dimension_numbers = #tpu.dot_dimension_numbers<[1], [0], [0], [1], [0, 0, 1, 1], [], []>} : vector<3x288xf32>, vector<288x288xf32>, vector<3x288xf32> -> vector<3x288xf32>
    %c0_43 = arith.constant 0 : index
    %c0_44 = arith.constant 0 : index
    %109 = vector.load %arg5[%c0_43, %c0_44] : memref<3x1xf32, #tpu.memory_space<vmem>>, vector<3x1xf32>
    %110 = vector.broadcast %109 : vector<3x1xf32> to vector<3x288xf32>
    %111 = arith.addf %108, %110 : vector<3x288xf32>
    %112 = vector.extract_strided_slice %111 {offsets = [0, 0], sizes = [3, 16], strides = [1, 1]} : vector<3x288xf32> to vector<3x16xf32>
    %c0_45 = arith.constant 0 : index
    %c0_46 = arith.constant 0 : index
    %c0_47 = arith.constant 0 : index
    %113 = vector.load %arg6[%c0_45, %c0_46, %c0_47] : memref<1x3x256xf32, #tpu.memory_space<vmem>>, vector<1x3x16xf32>
    %114 = vector.shape_cast %113 : vector<1x3x16xf32> to vector<3x16xf32>
    %115 = vector.shape_cast %112 : vector<3x16xf32> to vector<1x3x16xf32>
    tpu.vector_store %arg6[%c0_45, %c0_46, %c0_47], %115 {strides = array<i32>} : memref<1x3x256xf32, #tpu.memory_space<vmem>>, vector<1x3x16xf32>,
    %116 = vector.extract_strided_slice %111 {offsets = [0, 18], sizes = [3, 16], strides = [1, 1]} : vector<3x288xf32> to vector<3x16xf32>
    %c0_48 = arith.constant 0 : index
    %c0_49 = arith.constant 0 : index
    %c16 = arith.constant 16 : index
    %117 = vector.load %arg6[%c0_48, %c0_49, %c16] : memref<1x3x256xf32, #tpu.memory_space<vmem>>, vector<1x3x16xf32>
    %118 = vector.shape_cast %117 : vector<1x3x16xf32> to vector<3x16xf32>
    %119 = vector.shape_cast %116 : vector<3x16xf32> to vector<1x3x16xf32>
    tpu.vector_store %arg6[%c0_48, %c0_49, %c16], %119 {strides = array<i32>} : memref<1x3x256xf32, #tpu.memory_space<vmem>>, vector<1x3x16xf32>,
    %120 = vector.extract_strided_slice %111 {offsets = [0, 36], sizes = [3, 16], strides = [1, 1]} : vector<3x288xf32> to vector<3x16xf32>
    %c0_50 = arith.constant 0 : index
    %c0_51 = arith.constant 0 : index
    %c32 = arith.constant 32 : index
    %121 = vector.load %arg6[%c0_50, %c0_51, %c32] : memref<1x3x256xf32, #tpu.memory_space<vmem>>, vector<1x3x16xf32>
    %122 = vector.shape_cast %121 : vector<1x3x16xf32> to vector<3x16xf32>
    %123 = vector.shape_cast %120 : vector<3x16xf32> to vector<1x3x16xf32>
    tpu.vector_store %arg6[%c0_50, %c0_51, %c32], %123 {strides = array<i32>} : memref<1x3x256xf32, #tpu.memory_space<vmem>>, vector<1x3x16xf32>,
    %124 = vector.extract_strided_slice %111 {offsets = [0, 54], sizes = [3, 16], strides = [1, 1]} : vector<3x288xf32> to vector<3x16xf32>
    %c0_52 = arith.constant 0 : index
    %c0_53 = arith.constant 0 : index
    %c48 = arith.constant 48 : index
    %125 = vector.load %arg6[%c0_52, %c0_53, %c48] : memref<1x3x256xf32, #tpu.memory_space<vmem>>, vector<1x3x16xf32>
    %126 = vector.shape_cast %125 : vector<1x3x16xf32> to vector<3x16xf32>
    %127 = vector.shape_cast %124 : vector<3x16xf32> to vector<1x3x16xf32>
    tpu.vector_store %arg6[%c0_52, %c0_53, %c48], %127 {strides = array<i32>} : memref<1x3x256xf32, #tpu.memory_space<vmem>>, vector<1x3x16xf32>,
    %128 = vector.extract_strided_slice %111 {offsets = [0, 72], sizes = [3, 16], strides = [1, 1]} : vector<3x288xf32> to vector<3x16xf32>
    %c0_54 = arith.constant 0 : index
    %c0_55 = arith.constant 0 : index
    %c64 = arith.constant 64 : index
    %129 = vector.load %arg6[%c0_54, %c0_55, %c64] : memref<1x3x256xf32, #tpu.memory_space<vmem>>, vector<1x3x16xf32>
    %130 = vector.shape_cast %129 : vector<1x3x16xf32> to vector<3x16xf32>
    %131 = vector.shape_cast %128 : vector<3x16xf32> to vector<1x3x16xf32>
    tpu.vector_store %arg6[%c0_54, %c0_55, %c64], %131 {strides = array<i32>} : memref<1x3x256xf32, #tpu.memory_space<vmem>>, vector<1x3x16xf32>,
    %132 = vector.extract_strided_slice %111 {offsets = [0, 90], sizes = [3, 16], strides = [1, 1]} : vector<3x288xf32> to vector<3x16xf32>
    %c0_56 = arith.constant 0 : index
    %c0_57 = arith.constant 0 : index
    %c80 = arith.constant 80 : index
    %133 = vector.load %arg6[%c0_56, %c0_57, %c80] : memref<1x3x256xf32, #tpu.memory_space<vmem>>, vector<1x3x16xf32>
    %134 = vector.shape_cast %133 : vector<1x3x16xf32> to vector<3x16xf32>
    %135 = vector.shape_cast %132 : vector<3x16xf32> to vector<1x3x16xf32>
    tpu.vector_store %arg6[%c0_56, %c0_57, %c80], %135 {strides = array<i32>} : memref<1x3x256xf32, #tpu.memory_space<vmem>>, vector<1x3x16xf32>,
    %136 = vector.extract_strided_slice %111 {offsets = [0, 108], sizes = [3, 16], strides = [1, 1]} : vector<3x288xf32> to vector<3x16xf32>
    %c0_58 = arith.constant 0 : index
    %c0_59 = arith.constant 0 : index
    %c96 = arith.constant 96 : index
    %137 = vector.load %arg6[%c0_58, %c0_59, %c96] : memref<1x3x256xf32, #tpu.memory_space<vmem>>, vector<1x3x16xf32>
    %138 = vector.shape_cast %137 : vector<1x3x16xf32> to vector<3x16xf32>
    %139 = vector.shape_cast %136 : vector<3x16xf32> to vector<1x3x16xf32>
    tpu.vector_store %arg6[%c0_58, %c0_59, %c96], %139 {strides = array<i32>} : memref<1x3x256xf32, #tpu.memory_space<vmem>>, vector<1x3x16xf32>,
    %140 = vector.extract_strided_slice %111 {offsets = [0, 126], sizes = [3, 16], strides = [1, 1]} : vector<3x288xf32> to vector<3x16xf32>
    %c0_60 = arith.constant 0 : index
    %c0_61 = arith.constant 0 : index
    %c112 = arith.constant 112 : index
    %141 = vector.load %arg6[%c0_60, %c0_61, %c112] : memref<1x3x256xf32, #tpu.memory_space<vmem>>, vector<1x3x16xf32>
    %142 = vector.shape_cast %141 : vector<1x3x16xf32> to vector<3x16xf32>
    %143 = vector.shape_cast %140 : vector<3x16xf32> to vector<1x3x16xf32>
    tpu.vector_store %arg6[%c0_60, %c0_61, %c112], %143 {strides = array<i32>} : memref<1x3x256xf32, #tpu.memory_space<vmem>>, vector<1x3x16xf32>,
    %144 = vector.extract_strided_slice %111 {offsets = [0, 144], sizes = [3, 16], strides = [1, 1]} : vector<3x288xf32> to vector<3x16xf32>
    %c0_62 = arith.constant 0 : index
    %c0_63 = arith.constant 0 : index
    %c128 = arith.constant 128 : index
    %145 = vector.load %arg6[%c0_62, %c0_63, %c128] : memref<1x3x256xf32, #tpu.memory_space<vmem>>, vector<1x3x16xf32>
    %146 = vector.shape_cast %145 : vector<1x3x16xf32> to vector<3x16xf32>
    %147 = vector.shape_cast %144 : vector<3x16xf32> to vector<1x3x16xf32>
    tpu.vector_store %arg6[%c0_62, %c0_63, %c128], %147 {strides = array<i32>} : memref<1x3x256xf32, #tpu.memory_space<vmem>>, vector<1x3x16xf32>,
    %148 = vector.extract_strided_slice %111 {offsets = [0, 162], sizes = [3, 16], strides = [1, 1]} : vector<3x288xf32> to vector<3x16xf32>
    %c0_64 = arith.constant 0 : index
    %c0_65 = arith.constant 0 : index
    %c144 = arith.constant 144 : index
    %149 = vector.load %arg6[%c0_64, %c0_65, %c144] : memref<1x3x256xf32, #tpu.memory_space<vmem>>, vector<1x3x16xf32>
    %150 = vector.shape_cast %149 : vector<1x3x16xf32> to vector<3x16xf32>
    %151 = vector.shape_cast %148 : vector<3x16xf32> to vector<1x3x16xf32>
    tpu.vector_store %arg6[%c0_64, %c0_65, %c144], %151 {strides = array<i32>} : memref<1x3x256xf32, #tpu.memory_space<vmem>>, vector<1x3x16xf32>,
    %152 = vector.extract_strided_slice %111 {offsets = [0, 180], sizes = [3, 16], strides = [1, 1]} : vector<3x288xf32> to vector<3x16xf32>
    %c0_66 = arith.constant 0 : index
    %c0_67 = arith.constant 0 : index
    %c160 = arith.constant 160 : index
    %153 = vector.load %arg6[%c0_66, %c0_67, %c160] : memref<1x3x256xf32, #tpu.memory_space<vmem>>, vector<1x3x16xf32>
    %154 = vector.shape_cast %153 : vector<1x3x16xf32> to vector<3x16xf32>
    %155 = vector.shape_cast %152 : vector<3x16xf32> to vector<1x3x16xf32>
    tpu.vector_store %arg6[%c0_66, %c0_67, %c160], %155 {strides = array<i32>} : memref<1x3x256xf32, #tpu.memory_space<vmem>>, vector<1x3x16xf32>,
    %156 = vector.extract_strided_slice %111 {offsets = [0, 198], sizes = [3, 16], strides = [1, 1]} : vector<3x288xf32> to vector<3x16xf32>
    %c0_68 = arith.constant 0 : index
    %c0_69 = arith.constant 0 : index
    %c176 = arith.constant 176 : index
    %157 = vector.load %arg6[%c0_68, %c0_69, %c176] : memref<1x3x256xf32, #tpu.memory_space<vmem>>, vector<1x3x16xf32>
    %158 = vector.shape_cast %157 : vector<1x3x16xf32> to vector<3x16xf32>
    %159 = vector.shape_cast %156 : vector<3x16xf32> to vector<1x3x16xf32>
    tpu.vector_store %arg6[%c0_68, %c0_69, %c176], %159 {strides = array<i32>} : memref<1x3x256xf32, #tpu.memory_space<vmem>>, vector<1x3x16xf32>,
    %160 = vector.extract_strided_slice %111 {offsets = [0, 216], sizes = [3, 16], strides = [1, 1]} : vector<3x288xf32> to vector<3x16xf32>
    %c0_70 = arith.constant 0 : index
    %c0_71 = arith.constant 0 : index
    %c192 = arith.constant 192 : index
    %161 = vector.load %arg6[%c0_70, %c0_71, %c192] : memref<1x3x256xf32, #tpu.memory_space<vmem>>, vector<1x3x16xf32>
    %162 = vector.shape_cast %161 : vector<1x3x16xf32> to vector<3x16xf32>
    %163 = vector.shape_cast %160 : vector<3x16xf32> to vector<1x3x16xf32>
    tpu.vector_store %arg6[%c0_70, %c0_71, %c192], %163 {strides = array<i32>} : memref<1x3x256xf32, #tpu.memory_space<vmem>>, vector<1x3x16xf32>,
    %164 = vector.extract_strided_slice %111 {offsets = [0, 234], sizes = [3, 16], strides = [1, 1]} : vector<3x288xf32> to vector<3x16xf32>
    %c0_72 = arith.constant 0 : index
    %c0_73 = arith.constant 0 : index
    %c208 = arith.constant 208 : index
    %165 = vector.load %arg6[%c0_72, %c0_73, %c208] : memref<1x3x256xf32, #tpu.memory_space<vmem>>, vector<1x3x16xf32>
    %166 = vector.shape_cast %165 : vector<1x3x16xf32> to vector<3x16xf32>
    %167 = vector.shape_cast %164 : vector<3x16xf32> to vector<1x3x16xf32>
    tpu.vector_store %arg6[%c0_72, %c0_73, %c208], %167 {strides = array<i32>} : memref<1x3x256xf32, #tpu.memory_space<vmem>>, vector<1x3x16xf32>,
    %168 = vector.extract_strided_slice %111 {offsets = [0, 252], sizes = [3, 16], strides = [1, 1]} : vector<3x288xf32> to vector<3x16xf32>
    %c0_74 = arith.constant 0 : index
    %c0_75 = arith.constant 0 : index
    %c224 = arith.constant 224 : index
    %169 = vector.load %arg6[%c0_74, %c0_75, %c224] : memref<1x3x256xf32, #tpu.memory_space<vmem>>, vector<1x3x16xf32>
    %170 = vector.shape_cast %169 : vector<1x3x16xf32> to vector<3x16xf32>
    %171 = vector.shape_cast %168 : vector<3x16xf32> to vector<1x3x16xf32>
    tpu.vector_store %arg6[%c0_74, %c0_75, %c224], %171 {strides = array<i32>} : memref<1x3x256xf32, #tpu.memory_space<vmem>>, vector<1x3x16xf32>,
    %172 = vector.extract_strided_slice %111 {offsets = [0, 270], sizes = [3, 16], strides = [1, 1]} : vector<3x288xf32> to vector<3x16xf32>
    %c0_76 = arith.constant 0 : index
    %c0_77 = arith.constant 0 : index
    %c240 = arith.constant 240 : index
    %173 = vector.load %arg6[%c0_76, %c0_77, %c240] : memref<1x3x256xf32, #tpu.memory_space<vmem>>, vector<1x3x16xf32>
    %174 = vector.shape_cast %173 : vector<1x3x16xf32> to vector<3x16xf32>
    %175 = vector.shape_cast %172 : vector<3x16xf32> to vector<1x3x16xf32>
    tpu.vector_store %arg6[%c0_76, %c0_77, %c240], %175 {strides = array<i32>} : memref<1x3x256xf32, #tpu.memory_space<vmem>>, vector<1x3x16xf32>,
    return
  }
  func.func @transform_0(%arg0: i32) -> (i32, i32, i32, i32) {
    %c0_i32 = arith.constant 0 : i32
    %c0_i32_0 = arith.constant 0 : i32
    %c0_i32_1 = arith.constant 0 : i32
    %c0_i32_2 = arith.constant 0 : i32
    return %arg0, %c0_i32, %c0_i32_0, %c0_i32_1 : i32, i32, i32, i32
  }
  func.func @transform_1(%arg0: i32) -> (i32, i32) {
    %c0_i32 = arith.constant 0 : i32
    %c0_i32_0 = arith.constant 0 : i32
    %c0_i32_1 = arith.constant 0 : i32
    return %c0_i32, %c0_i32_0 : i32, i32
  }
  func.func @transform_2(%arg0: i32) -> (i32, i32) {
    %c0_i32 = arith.constant 0 : i32
    %c0_i32_0 = arith.constant 0 : i32
    %c0_i32_1 = arith.constant 0 : i32
    return %c0_i32, %c0_i32_0 : i32, i32
  }
  func.func @transform_3(%arg0: i32) -> (i32, i32) {
    %c0_i32 = arith.constant 0 : i32
    %c0_i32_0 = arith.constant 0 : i32
    %c0_i32_1 = arith.constant 0 : i32
    return %c0_i32, %c0_i32_0 : i32, i32
  }
  func.func @transform_4(%arg0: i32) -> (i32, i32) {
    %c0_i32 = arith.constant 0 : i32
    %c0_i32_0 = arith.constant 0 : i32
    %c0_i32_1 = arith.constant 0 : i32
    return %c0_i32, %c0_i32_0 : i32, i32
  }
  func.func @transform_5(%arg0: i32) -> (i32, i32, i32) {
    %c0_i32 = arith.constant 0 : i32
    %c0_i32_0 = arith.constant 0 : i32
    %c0_i32_1 = arith.constant 0 : i32
    return %arg0, %c0_i32, %c0_i32_0 : i32, i32, i32
  }
}

</mosaic_0001>

<llo_original>
// kernel: pred_head_forward.1
$region0: #{pred_head_forward.1}
  #allocation0 [shape = 'u32[]', space=smem, size = 0x4, offset = 0x4, fixed_abs, tag = 'smem constant byte address 0x4 - core index']
  #allocation1 [shape = 'u32[72,128]{1,0:T(1,128)}', space=vmem, size = 0x9000, scoped, tag = 'internal scratch']
  #allocation2 [shape = 'f32[8,326]{1,0:T(8,128)}', space=vmem, size = 0x3000, scoped, tag = 'scratch operand']
  #allocation3 [shape = 'f32[32,326]{1,0:T(8,128)}', space=vmem, size = 0xc000, scoped, tag = 'scratch operand']
  %s0 = inlined_call_operand.hbm [shape: f32[2,8,16,16], index: 0, kind: input, shape index: {}]
  %s1 = inlined_call_operand.vmem [shape: f32[32,72], index: 1, kind: input, shape index: {}]
  %s2 = inlined_call_operand.vmem [shape: f32[32,1], index: 2, kind: input, shape index: {}]
  %s3 = inlined_call_operand.vmem [shape: f32[3,288], index: 3, kind: input, shape index: {}]
  %s4 = inlined_call_operand.vmem [shape: f32[3,1], index: 4, kind: input, shape index: {}]
  %s5 = inlined_call_operand.vmem [shape: f32[2,3,256], index: 5, kind: output, shape index: {}]
  %s6 = sld [smem:[#allocation0]]
  $region57: #{pred_head_forward.1} parent=0
    _
  %s8 = ssub.s32 1, %s6
  %s9 = scalar_select 0, %s8, %s6
  $region1: #{pred_head_forward.1} parent=0
    #allocation4 [shape = 'u8[131072]{0}', space=vmem, size = 0x20000, scoped, tag = 'input window, operand 0']
    #allocation5 [shape = 's32[2]{0}', space=sflag, size = 0x8, scoped, tag = 'scoped memory for pred_head_forward.1']
    %10 = vsyncpa [#allocation5], 0
    %s11 = scalar_lea.sflag [#allocation5], 1
    %12 = vsyncpa %s11, 0
    loop: start=0, step=1, limit=4
    $region2: #{pred_head_forward.1} parent=1 // loop_pre_header
      _
    $region3: #{pred_head_forward.1} parent=1 // loop_header
      %s14 = sphi 0, %s18
      %p15 = scmp.ge.s32.totalorder %s14, 4
      %s24 = sphi 0, %s26
      %s27 = sphi 0, %s24
      %s28 = sphi 0, %s27
      %s44 = sphi 0, %s28
      %s48 = sphi 0, %s48
      %s50 = sphi 0, %s48
      %s51 = sphi 0, %s50
      %s65 = sphi 0, %s51
      %s69 = sphi 0, %s69
      %s71 = sphi 0, %s69
      %s72 = sphi 0, %s71
      %s86 = sphi 0, %s72
      %s90 = sphi 0, %s90
      %s92 = sphi 0, %s90
      %s93 = sphi 0, %s92
      %s107 = sphi 0, %s93
      %s111 = sphi 0, %s111
      %s113 = sphi 0, %s111
      %s114 = sphi 0, %s113
      %s128 = sphi 0, %s114
      %s134 = sphi 0, %s136
      %s137 = sphi 0, %s134
      %s138 = sphi 0, %s137
      %s154 = sphi 0, %s138
    $region4: #{pred_head_forward.1} parent=1 // loop_header_branch
      %17 = sbr.rel (%p15) target = $region8
    $region5: #{pred_head_forward.1} parent=1 // loop_body
      %s19 = ssub.s32 %s14, 1
      %s20 = ssub.s32 %s14, 2
      %s21 = sadd.s32 %s14, 1
      %s22 = ssub.s32 %s14, %s21
      %p23 = scmp.eq.s32.totalorder %s22, 0
      %s25 = sadd.s32 %s24, 1
      %s26 = scalar_select %p23, %s24, %s25
      %p29 = pneg %p23
      %p30 = scmp.eq.s32.totalorder %s14, 1
      %p31 = por %p29, %p30
      %p32 = scmp.ne.s32.totalorder %s24, %s27
      %p33 = scmp.eq.s32.totalorder %s14, 0
      %p34 = por %p32, %p33
      %p35 = scmp.ne.s32.totalorder %s24, %s27
      %p36 = scmp.eq.s32.totalorder %s19, 1
      %p37 = por %p35, %p36
      %p38 = scmp.ne.s32.totalorder %s27, %s28
      %p39 = scmp.eq.s32.totalorder %s19, 0
      %p40 = por %p38, %p39
      %p41 = scmp.ne.s32.totalorder %s27, %s28
      %p42 = scmp.eq.s32.totalorder %s20, 1
      %p43 = por %p41, %p42
      %p45 = scmp.ne.s32.totalorder %s28, %s44
      %p46 = scmp.eq.s32.totalorder %s20, 0
      %p47 = por %p45, %p46
      %s49 = sadd.s32 %s48, 1
      %p52 = scmp.eq.s32.totalorder %s14, 1
      %p53 = scmp.ne.s32.totalorder %s48, %s50
      %p54 = scmp.eq.s32.totalorder %s14, 0
      %p55 = por %p53, %p54
      %p56 = scmp.ne.s32.totalorder %s48, %s50
      %p57 = scmp.eq.s32.totalorder %s19, 1
      %p58 = por %p56, %p57
      %p59 = scmp.ne.s32.totalorder %s50, %s51
      %p60 = scmp.eq.s32.totalorder %s19, 0
      %p61 = por %p59, %p60
      %p62 = scmp.ne.s32.totalorder %s50, %s51
      %p63 = scmp.eq.s32.totalorder %s20, 1
      %p64 = por %p62, %p63
      %p66 = scmp.ne.s32.totalorder %s51, %s65
      %p67 = scmp.eq.s32.totalorder %s20, 0
      %p68 = por %p66, %p67
      %s70 = sadd.s32 %s69, 1
      %p73 = scmp.eq.s32.totalorder %s14, 1
      %p74 = scmp.ne.s32.totalorder %s69, %s71
      %p75 = scmp.eq.s32.totalorder %s14, 0
      %p76 = por %p74, %p75
      %p77 = scmp.ne.s32.totalorder %s69, %s71
      %p78 = scmp.eq.s32.totalorder %s19, 1
      %p79 = por %p77, %p78
      %p80 = scmp.ne.s32.totalorder %s71, %s72
      %p81 = scmp.eq.s32.totalorder %s19, 0
      %p82 = por %p80, %p81
      %p83 = scmp.ne.s32.totalorder %s71, %s72
      %p84 = scmp.eq.s32.totalorder %s20, 1
      %p85 = por %p83, %p84
      %p87 = scmp.ne.s32.totalorder %s72, %s86
      %p88 = scmp.eq.s32.totalorder %s20, 0
      %p89 = por %p87, %p88
      %s91 = sadd.s32 %s90, 1
      %p94 = scmp.eq.s32.totalorder %s14, 1
      %p95 = scmp.ne.s32.totalorder %s90, %s92
      %p96 = scmp.eq.s32.totalorder %s14, 0
      %p97 = por %p95, %p96
      %p98 = scmp.ne.s32.totalorder %s90, %s92
      %p99 = scmp.eq.s32.totalorder %s19, 1
      %p100 = por %p98, %p99
      %p101 = scmp.ne.s32.totalorder %s92, %s93
      %p102 = scmp.eq.s32.totalorder %s19, 0
      %p103 = por %p101, %p102
      %p104 = scmp.ne.s32.totalorder %s92, %s93
      %p105 = scmp.eq.s32.totalorder %s20, 1
      %p106 = por %p104, %p105
      %p108 = scmp.ne.s32.totalorder %s93, %s107
      %p109 = scmp.eq.s32.totalorder %s20, 0
      %p110 = por %p108, %p109
      %s112 = sadd.s32 %s111, 1
      %p115 = scmp.eq.s32.totalorder %s14, 1
      %p116 = scmp.ne.s32.totalorder %s111, %s113
      %p117 = scmp.eq.s32.totalorder %s14, 0
      %p118 = por %p116, %p117
      %p119 = scmp.ne.s32.totalorder %s111, %s113
      %p120 = scmp.eq.s32.totalorder %s19, 1
      %p121 = por %p119, %p120
      %p122 = scmp.ne.s32.totalorder %s113, %s114
      %p123 = scmp.eq.s32.totalorder %s19, 0
      %p124 = por %p122, %p123
      %p125 = scmp.ne.s32.totalorder %s113, %s114
      %p126 = scmp.eq.s32.totalorder %s20, 1
      %p127 = por %p125, %p126
      %p129 = scmp.ne.s32.totalorder %s114, %s128
      %p130 = scmp.eq.s32.totalorder %s20, 0
      %p131 = por %p129, %p130
      %s132 = ssub.s32 %s14, %s21
      %p133 = scmp.eq.s32.totalorder %s132, 0
      %s135 = sadd.s32 %s134, 1
      %s136 = scalar_select %p133, %s134, %s135
      %p139 = pneg %p133
      %p140 = scmp.eq.s32.totalorder %s14, 1
      %p141 = por %p139, %p140
      %p142 = scmp.ne.s32.totalorder %s134, %s137
      %p143 = scmp.eq.s32.totalorder %s14, 0
      %p144 = por %p142, %p143
      %p145 = scmp.ne.s32.totalorder %s134, %s137
      %p146 = scmp.eq.s32.totalorder %s19, 1
      %p147 = por %p145, %p146
      %p148 = scmp.ne.s32.totalorder %s137, %s138
      %p149 = scmp.eq.s32.totalorder %s19, 0
      %p150 = por %p148, %p149
      %p151 = scmp.ne.s32.totalorder %s137, %s138
      %p152 = scmp.eq.s32.totalorder %s20, 1
      %p153 = por %p151, %p152
      %p155 = scmp.ne.s32.totalorder %s138, %s154
      %p156 = scmp.eq.s32.totalorder %s20, 0
      %p157 = por %p155, %p156
      %p158 = scmp.le.s32.totalorder 1, %s14
      %p159 = scmp.lt.s32.totalorder %s14, 3
      %p160 = pnand %p158, %p159
      %p161 = pneg %p160
      // Predicated region
      $region9: #{pred_head_forward.1} parent=5 // pred_check
        _
      $region10: #{pred_head_forward.1} parent=5 // pred_check_branch
        %163 = sbr.rel (%p160) target = $region12
      $region11: #{pred_head_forward.1} parent=5 // pred_region
        %s164 = ssub.s32 %s14, 1
        // Predicated region
        $region13: #{pred_head_forward.1} parent=11 // pred_check
          %p165 = pneg %p61
        $region14: #{pred_head_forward.1} parent=11 // pred_check_branch
          %167 = sbr.rel (%p165) target = $region16
        $region15: #{pred_head_forward.1} parent=11 // pred_region
          _
        $region16: #{pred_head_forward.1} parent=11 // pred_fallthru
          _
        // Predicated region
        $region17: #{pred_head_forward.1} parent=11 // pred_check
          %p168 = pneg %p82
        $region18: #{pred_head_forward.1} parent=11 // pred_check_branch
          %170 = sbr.rel (%p168) target = $region20
        $region19: #{pred_head_forward.1} parent=11 // pred_region
          _
        $region20: #{pred_head_forward.1} parent=11 // pred_fallthru
          _
        // Predicated region
        $region21: #{pred_head_forward.1} parent=11 // pred_check
          %p171 = pneg %p103
        $region22: #{pred_head_forward.1} parent=11 // pred_check_branch
          %173 = sbr.rel (%p171) target = $region24
        $region23: #{pred_head_forward.1} parent=11 // pred_region
          _
        $region24: #{pred_head_forward.1} parent=11 // pred_fallthru
          _
        // Predicated region
        $region25: #{pred_head_forward.1} parent=11 // pred_check
          %p174 = pneg %p124
        $region26: #{pred_head_forward.1} parent=11 // pred_check_branch
          %176 = sbr.rel (%p174) target = $region28
        $region27: #{pred_head_forward.1} parent=11 // pred_region
          _
        $region28: #{pred_head_forward.1} parent=11 // pred_fallthru
          _
      $region12: #{pred_head_forward.1} parent=5 // pred_fallthru
        _
      %p177 = scmp.lt.s32.totalorder %s14, 2
      // Predicated region
      $region29: #{pred_head_forward.1} parent=5 // pred_check
        %p178 = pneg %p177
      $region30: #{pred_head_forward.1} parent=5 // pred_check_branch
        %180 = sbr.rel (%p178) target = $region32
      $region31: #{pred_head_forward.1} parent=5 // pred_region
        // Predicated region
        $region33: #{pred_head_forward.1} parent=31 // pred_check
          %p181 = pneg %p34
        $region34: #{pred_head_forward.1} parent=31 // pred_check_branch
          %183 = sbr.rel (%p181) target = $region36
        $region35: #{pred_head_forward.1} parent=31 // pred_region
          %s184 = sand.u32 %s24, 1
          %s185 = scalar_lea.sflag [#allocation5], %s184
          %s186 = sand.u32 %s24, 1
          %s187 = smul.addr %s186, 128
          %s188 = scalar_lea.vmem [#allocation4], %s187
          %190 = vsyncadd %s185, 0
          %s191 = smul.addr %s14, 16
          %s192 = smul.addr %s191, 8
          %s193 = scalar_lea.hbm %s0, %s192
          %s194 = sshll.u32 %s193, 4
          %s195 = int_to_ptr.hbm [resolvable:$true] %s194
          %s196 = sshll.u32 %s188, 4
          %s197 = int_to_ptr.vmem [resolvable:$true] %s196
          %202 = dma.hbm_to_vmem [thread:$0]  %s195, 2048, %s197, %s185, 128, 128, 8
        $region36: #{pred_head_forward.1} parent=31 // pred_fallthru
          _
      $region32: #{pred_head_forward.1} parent=5 // pred_fallthru
        _
      %p203 = scmp.le.s32.totalorder 1, %s14
      %p204 = scmp.lt.s32.totalorder %s14, 3
      %p205 = pnand %p203, %p204
      %p206 = pneg %p205
      // Predicated region
      $region37: #{pred_head_forward.1} parent=5 // pred_check
        _
      $region38: #{pred_head_forward.1} parent=5 // pred_check_branch
        %208 = sbr.rel (%p205) target = $region40
      $region39: #{pred_head_forward.1} parent=5 // pred_region
        %s209 = ssub.s32 %s14, 1
        %s210 = sand.u32 %s27, 1
        %s211 = scalar_lea.sflag [#allocation5], %s210
        %s212 = sand.u32 %s27, 1
        %s213 = smul.addr %s212, 128
        %s214 = scalar_lea.vmem [#allocation4], %s213
        // Predicated region
        $region41: #{pred_head_forward.1} parent=39 // pred_check
          %p215 = pneg %p40
        $region42: #{pred_head_forward.1} parent=39 // pred_check_branch
          %217 = sbr.rel (%p215) target = $region44
        $region43: #{pred_head_forward.1} parent=39 // pred_region
          %219 = dma.done %s211, 2048
        $region44: #{pred_head_forward.1} parent=39 // pred_fallthru
          _
        %s220 = sand.u32 %s27, 1
        %s221 = scalar_lea.sflag [#allocation5], %s220
        %s222 = sand.u32 %s27, 1
        %s223 = smul.addr %s222, 128
        %s224 = scalar_lea.vmem [#allocation4], %s223
        %p225 = pneg %p40
        %p226 = pneg %p37
        %p227 = pneg %p61
        %p228 = pneg %p58
        %p229 = pneg %p82
        %p230 = pneg %p79
        %p231 = pneg %p103
        %p232 = pneg %p100
        %p233 = pneg %p124
        %p234 = pneg %p121
        %p235 = pneg %p150
        %p236 = pneg %p147
        %p237 = scmp.lt.s32.totalorder %s19, 1
        %s238 = scalar_select %p237, %s19, 1
        %s239 = smul.addr %s238, 2
        %s240 = smul.addr %s239, 4
        %s241 = scalar_lea.vmem %s5, %s240
        %p242 = scmp.lt.s32.totalorder %s19, 1
        %s243 = scalar_select %p242, %s19, 1
        %s244 = smul.addr %s243, 2
        %s245 = smul.addr %s244, 4
        %s246 = scalar_lea.vmem %s5, %s245
        %247 = vst [vmem:[#allocation2] sm:$0xff] 0.0
        %248 = vst [vmem:[#allocation2 + $0x8] sm:$0xff] 0.0
        %vm249 = vcmask 572416
        %250 = vst.msk [vmem:[#allocation2 + $0x10] sm:$0xff] %vm249, 0.0
        %251 = vst [vmem:[#allocation3] sm:$0xff] 0.0
        %252 = vst [vmem:[#allocation3 + $0x8] sm:$0xff] 0.0
        %253 = vst.msk [vmem:[#allocation3 + $0x10] sm:$0xff] %vm249, 0.0
        %254 = vst [vmem:[#allocation3 + $0x18] sm:$0xff] 0.0
        %255 = vst [vmem:[#allocation3 + $0x20] sm:$0xff] 0.0
        %256 = vst.msk [vmem:[#allocation3 + $0x28] sm:$0xff] %vm249, 0.0
        %257 = vst [vmem:[#allocation3 + $0x30] sm:$0xff] 0.0
        %258 = vst [vmem:[#allocation3 + $0x38] sm:$0xff] 0.0
        %259 = vst.msk [vmem:[#allocation3 + $0x40] sm:$0xff] %vm249, 0.0
        %260 = vst [vmem:[#allocation3 + $0x48] sm:$0xff] 0.0
        %261 = vst [vmem:[#allocation3 + $0x50] sm:$0xff] 0.0
        %262 = vst.msk [vmem:[#allocation3 + $0x58] sm:$0xff] %vm249, 0.0
        %v263 = vld [vmem:[%s214] sm:$0xff]
        %v264 = vld [vmem:[%s214 + $0x8] sm:$0xff]
        %v265 = vld [vmem:[%s214 + $0x10] sm:$0xff]
        %v266 = vld [vmem:[%s214 + $0x18] sm:$0xff]
        %v267 = vld [vmem:[%s214 + $0x20] sm:$0xff]
        %v268 = vld [vmem:[%s214 + $0x28] sm:$0xff]
        %v269 = vld [vmem:[%s214 + $0x30] sm:$0xff]
        %v270 = vld [vmem:[%s214 + $0x38] sm:$0xff]
        %v271 = vld [vmem:[%s214 + $0x40] sm:$0xff]
        %v272 = vld [vmem:[%s214 + $0x48] sm:$0xff]
        %v273 = vld [vmem:[%s214 + $0x50] sm:$0xff]
        %v274 = vld [vmem:[%s214 + $0x58] sm:$0xff]
        %v275 = vld [vmem:[%s214 + $0x60] sm:$0xff]
        %v276 = vld [vmem:[%s214 + $0x68] sm:$0xff]
        %v277 = vld [vmem:[%s214 + $0x70] sm:$0xff]
        %v278 = vld [vmem:[%s214 + $0x78] sm:$0xff]
        %v287 = vrot.slane %v265, 7
        %vm288 = vcmask 1041409
        %v289 = vsel %vm288, %v287, %v263
        %v290 = vrot.slane %v267, 6
        %vm291 = vcmask 1042434
        %v292 = vsel %vm291, %v290, %v289
        %v293 = vrot.slane %v269, 5
        %vm294 = vcmask 1043459
        %v295 = vsel %vm294, %v293, %v292
        %v296 = vrot.slane %v271, 4
        %vm297 = vcmask 1044484
        %v298 = vsel %vm297, %v296, %v295
        %v299 = vrot.slane %v273, 3
        %vm300 = vcmask 1045509
        %v301 = vsel %vm300, %v299, %v298
        %v302 = vrot.slane %v275, 2
        %vm303 = vcmask 1046534
        %v304 = vsel %vm303, %v302, %v301
        %v305 = vrot.slane %v277, 1
        %vm306 = vcmask 1047559
        %v307 = vsel %vm306, %v305, %v304
        %308 = vrot.lane.b32.xlu0 %v307, 19
        %v309 = vpop.permute.xlu0 %308
        %vm311 = vcmask 285848
        %312 = vst.msk [vmem:[#allocation2] sm:$0xff] %vm311, %v309
        %v313 = vrot.slane %v263, 1
        %v314 = vsel %vm288, %v265, %v313
        %v315 = vrot.slane %v267, 7
        %v316 = vsel %vm291, %v315, %v314
        %v317 = vrot.slane %v269, 6
        %v318 = vsel %vm294, %v317, %v316
        %v319 = vrot.slane %v271, 5
        %v320 = vsel %vm297, %v319, %v318
        %v321 = vrot.slane %v273, 4
        %v322 = vsel %vm300, %v321, %v320
        %v323 = vrot.slane %v275, 3
        %v324 = vsel %vm303, %v323, %v322
        %v325 = vrot.slane %v277, 2
        %v326 = vsel %vm306, %v325, %v324
        %327 = vrot.lane.b32.xlu0 %v326, 37
        %v328 = vpop.permute.xlu0 %327
        %vm330 = vcmask 433448
        %331 = vst.msk [vmem:[#allocation2] sm:$0xff] %vm330, %v328
        %v332 = vrot.slane %v263, 2
        %v333 = vrot.slane %v265, 1
        %v334 = vsel %vm288, %v333, %v332
        %v335 = vsel %vm291, %v267, %v334
        %v336 = vrot.slane %v269, 7
        %v337 = vsel %vm294, %v336, %v335
        %v338 = vrot.slane %v271, 6
        %v339 = vsel %vm297, %v338, %v337
        %v340 = vrot.slane %v273, 5
        %v341 = vsel %vm300, %v340, %v339
        %v342 = vrot.slane %v275, 4
        %v343 = vsel %vm303, %v342, %v341
        %v344 = vrot.slane %v277, 3
        %v345 = vsel %vm306, %v344, %v343
        %346 = vrot.lane.b32.xlu0 %v345, 55
        %v347 = vpop.permute.xlu0 %346
        %vm349 = vcmask 581048
        %350 = vst.msk [vmem:[#allocation2] sm:$0xff] %vm349, %v347
        %v351 = vrot.slane %v263, 3
        %v352 = vrot.slane %v265, 2
        %v353 = vsel %vm288, %v352, %v351
        %v354 = vrot.slane %v267, 1
        %v355 = vsel %vm291, %v354, %v353
        %v356 = vsel %vm294, %v269, %v355
        %v357 = vrot.slane %v271, 7
        %v358 = vsel %vm297, %v357, %v356
        %v359 = vrot.slane %v273, 6
        %v360 = vsel %vm300, %v359, %v358
        %v361 = vrot.slane %v275, 5
        %v362 = vsel %vm303, %v361, %v360
        %v363 = vrot.slane %v277, 4
        %v364 = vsel %vm306, %v363, %v362
        %365 = vrot.lane.b32.xlu0 %v364, 73
        %v366 = vpop.permute.xlu0 %365
        %vm368 = vcmask 728648
        %369 = vst.msk [vmem:[#allocation2] sm:$0xff] %vm368, %v366
        %v370 = vrot.slane %v263, 4
        %v371 = vrot.slane %v265, 3
        %v372 = vsel %vm288, %v371, %v370
        %v373 = vrot.slane %v267, 2
        %v374 = vsel %vm291, %v373, %v372
        %v375 = vrot.slane %v269, 1
        %v376 = vsel %vm294, %v375, %v374
        %v377 = vsel %vm297, %v271, %v376
        %v378 = vrot.slane %v273, 7
        %v379 = vsel %vm300, %v378, %v377
        %v380 = vrot.slane %v275, 6
        %v381 = vsel %vm303, %v380, %v379
        %v382 = vrot.slane %v277, 5
        %v383 = vsel %vm306, %v382, %v381
        %384 = vrot.lane.b32.xlu0 %v383, 91
        %v385 = vpop.permute.xlu0 %384
        %vm387 = vcmask 876248
        %388 = vst.msk [vmem:[#allocation2] sm:$0xff] %vm387, %v385
        %v389 = vrot.slane %v263, 5
        %v390 = vrot.slane %v265, 4
        %v391 = vsel %vm288, %v390, %v389
        %v392 = vrot.slane %v267, 3
        %v393 = vsel %vm291, %v392, %v391
        %v394 = vrot.slane %v269, 2
        %v395 = vsel %vm294, %v394, %v393
        %v396 = vrot.slane %v271, 1
        %v397 = vsel %vm297, %v396, %v395
        %v398 = vsel %vm300, %v273, %v397
        %v399 = vrot.slane %v275, 7
        %v400 = vsel %vm303, %v399, %v398
        %v401 = vrot.slane %v277, 6
        %v402 = vsel %vm306, %v401, %v400
        %403 = vrot.lane.b32.xlu0 %v402, 109
        %v404 = vpop.permute.xlu0 %403
        %vm406 = vcmask 1023848
        %407 = vst.msk [vmem:[#allocation2] sm:$0xff] %vm406, %v404
        %v408 = vrot.slane %v263, 6
        %v409 = vrot.slane %v265, 5
        %v410 = vsel %vm288, %v409, %v408
        %v411 = vrot.slane %v267, 4
        %v412 = vsel %vm291, %v411, %v410
        %v413 = vrot.slane %v269, 3
        %v414 = vsel %vm294, %v413, %v412
        %v415 = vrot.slane %v271, 2
        %v416 = vsel %vm297, %v415, %v414
        %v417 = vrot.slane %v273, 1
        %v418 = vsel %vm300, %v417, %v416
        %v419 = vsel %vm303, %v275, %v418
        %v420 = vrot.slane %v277, 7
        %v421 = vsel %vm306, %v420, %v419
        %422 = vrot.lane.b32.xlu0 %v421, 127
        %v423 = vpop.permute.xlu0 %422
        %vm425 = vcmask 1048568
        %426 = vst.msk [vmem:[#allocation2] sm:$0xff] %vm425, %v423
        %vm427 = vcmask 121856
        %428 = vst.msk [vmem:[#allocation2 + $0x8] sm:$0xff] %vm427, %v423
        %v429 = vrot.slane %v263, 7
        %v430 = vrot.slane %v265, 6
        %v431 = vsel %vm288, %v430, %v429
        %v432 = vrot.slane %v267, 5
        %v433 = vsel %vm291, %v432, %v431
        %v434 = vrot.slane %v269, 4
        %v435 = vsel %vm294, %v434, %v433
        %v436 = vrot.slane %v271, 3
        %v437 = vsel %vm297, %v436, %v435
        %v438 = vrot.slane %v273, 2
        %v439 = vsel %vm300, %v438, %v437
        %v440 = vrot.slane %v275, 1
        %v441 = vsel %vm303, %v440, %v439
        %v442 = vsel %vm306, %v277, %v441
        %443 = vrot.lane.b32.xlu0 %v442, 17
        %v444 = vpop.permute.xlu0 %443
        %vm446 = vcmask 269448
        %447 = vst.msk [vmem:[#allocation2 + $0x8] sm:$0xff] %vm446, %v444
        %v456 = vrot.slane %v266, 7
        %v457 = vsel %vm288, %v456, %v264
        %v458 = vrot.slane %v268, 6
        %v459 = vsel %vm291, %v458, %v457
        %v460 = vrot.slane %v270, 5
        %v461 = vsel %vm294, %v460, %v459
        %v462 = vrot.slane %v272, 4
        %v463 = vsel %vm297, %v462, %v461
        %v464 = vrot.slane %v274, 3
        %v465 = vsel %vm300, %v464, %v463
        %v466 = vrot.slane %v276, 2
        %v467 = vsel %vm303, %v466, %v465
        %v468 = vrot.slane %v278, 1
        %v469 = vsel %vm306, %v468, %v467
        %470 = vrot.lane.b32.xlu0 %v469, 35
        %v471 = vpop.permute.xlu0 %470
        %vm473 = vcmask 417048
        %474 = vst.msk [vmem:[#allocation2 + $0x8] sm:$0xff] %vm473, %v471
        %v475 = vrot.slane %v264, 1
        %v476 = vsel %vm288, %v266, %v475
        %v477 = vrot.slane %v268, 7
        %v478 = vsel %vm291, %v477, %v476
        %v479 = vrot.slane %v270, 6
        %v480 = vsel %vm294, %v479, %v478
        %v481 = vrot.slane %v272, 5
        %v482 = vsel %vm297, %v481, %v480
        %v483 = vrot.slane %v274, 4
        %v484 = vsel %vm300, %v483, %v482
        %v485 = vrot.slane %v276, 3
        %v486 = vsel %vm303, %v485, %v484
        %v487 = vrot.slane %v278, 2
        %v488 = vsel %vm306, %v487, %v486
        %489 = vrot.lane.b32.xlu0 %v488, 53
        %v490 = vpop.permute.xlu0 %489
        %vm492 = vcmask 564648
        %493 = vst.msk [vmem:[#allocation2 + $0x8] sm:$0xff] %vm492, %v490
        %v494 = vrot.slane %v264, 2
        %v495 = vrot.slane %v266, 1
        %v496 = vsel %vm288, %v495, %v494
        %v497 = vsel %vm291, %v268, %v496
        %v498 = vrot.slane %v270, 7
        %v499 = vsel %vm294, %v498, %v497
        %v500 = vrot.slane %v272, 6
        %v501 = vsel %vm297, %v500, %v499
        %v502 = vrot.slane %v274, 5
        %v503 = vsel %vm300, %v502, %v501
        %v504 = vrot.slane %v276, 4
        %v505 = vsel %vm303, %v504, %v503
        %v506 = vrot.slane %v278, 3
        %v507 = vsel %vm306, %v506, %v505
        %508 = vrot.lane.b32.xlu0 %v507, 71
        %v509 = vpop.permute.xlu0 %508
        %vm511 = vcmask 712248
        %512 = vst.msk [vmem:[#allocation2 + $0x8] sm:$0xff] %vm511, %v509
        %v513 = vrot.slane %v264, 3
        %v514 = vrot.slane %v266, 2
        %v515 = vsel %vm288, %v514, %v513
        %v516 = vrot.slane %v268, 1
        %v517 = vsel %vm291, %v516, %v515
        %v518 = vsel %vm294, %v270, %v517
        %v519 = vrot.slane %v272, 7
        %v520 = vsel %vm297, %v519, %v518
        %v521 = vrot.slane %v274, 6
        %v522 = vsel %vm300, %v521, %v520
        %v523 = vrot.slane %v276, 5
        %v524 = vsel %vm303, %v523, %v522
        %v525 = vrot.slane %v278, 4
        %v526 = vsel %vm306, %v525, %v524
        %527 = vrot.lane.b32.xlu0 %v526, 89
        %v528 = vpop.permute.xlu0 %527
        %vm530 = vcmask 859848
        %531 = vst.msk [vmem:[#allocation2 + $0x8] sm:$0xff] %vm530, %v528
        %v532 = vrot.slane %v264, 4
        %v533 = vrot.slane %v266, 3
        %v534 = vsel %vm288, %v533, %v532
        %v535 = vrot.slane %v268, 2
        %v536 = vsel %vm291, %v535, %v534
        %v537 = vrot.slane %v270, 1
        %v538 = vsel %vm294, %v537, %v536
        %v539 = vsel %vm297, %v272, %v538
        %v540 = vrot.slane %v274, 7
        %v541 = vsel %vm300, %v540, %v539
        %v542 = vrot.slane %v276, 6
        %v543 = vsel %vm303, %v542, %v541
        %v544 = vrot.slane %v278, 5
        %v545 = vsel %vm306, %v544, %v543
        %546 = vrot.lane.b32.xlu0 %v545, 107
        %v547 = vpop.permute.xlu0 %546
        %vm549 = vcmask 1007448
        %550 = vst.msk [vmem:[#allocation2 + $0x8] sm:$0xff] %vm549, %v547
        %v551 = vrot.slane %v264, 5
        %v552 = vrot.slane %v266, 4
        %v553 = vsel %vm288, %v552, %v551
        %v554 = vrot.slane %v268, 3
        %v555 = vsel %vm291, %v554, %v553
        %v556 = vrot.slane %v270, 2
        %v557 = vsel %vm294, %v556, %v555
        %v558 = vrot.slane %v272, 1
        %v559 = vsel %vm297, %v558, %v557
        %v560 = vsel %vm300, %v274, %v559
        %v561 = vrot.slane %v276, 7
        %v562 = vsel %vm303, %v561, %v560
        %v563 = vrot.slane %v278, 6
        %v564 = vsel %vm306, %v563, %v562
        %565 = vrot.lane.b32.xlu0 %v564, 125
        %v566 = vpop.permute.xlu0 %565
        %vm568 = vcmask 1048552
        %569 = vst.msk [vmem:[#allocation2 + $0x8] sm:$0xff] %vm568, %v566
        %vm570 = vcmask 105472
        %571 = vst.msk [vmem:[#allocation2 + $0x10] sm:$0xff] %vm570, %v566
        %v572 = vrot.slane %v264, 6
        %v573 = vrot.slane %v266, 5
        %v574 = vsel %vm288, %v573, %v572
        %v575 = vrot.slane %v268, 4
        %v576 = vsel %vm291, %v575, %v574
        %v577 = vrot.slane %v270, 3
        %v578 = vsel %vm294, %v577, %v576
        %v579 = vrot.slane %v272, 2
        %v580 = vsel %vm297, %v579, %v578
        %v581 = vrot.slane %v274, 1
        %v582 = vsel %vm300, %v581, %v580
        %v583 = vsel %vm303, %v276, %v582
        %v584 = vrot.slane %v278, 7
        %v585 = vsel %vm306, %v584, %v583
        %586 = vrot.lane.b32.xlu0 %v585, 15
        %v587 = vpop.permute.xlu0 %586
        %vm589 = vcmask 253048
        %590 = vst.msk [vmem:[#allocation2 + $0x10] sm:$0xff] %vm589, %v587
        %v591 = vrot.slane %v264, 7
        %v592 = vrot.slane %v266, 6
        %v593 = vsel %vm288, %v592, %v591
        %v594 = vrot.slane %v268, 5
        %v595 = vsel %vm291, %v594, %v593
        %v596 = vrot.slane %v270, 4
        %v597 = vsel %vm294, %v596, %v595
        %v598 = vrot.slane %v272, 3
        %v599 = vsel %vm297, %v598, %v597
        %v600 = vrot.slane %v274, 2
        %v601 = vsel %vm300, %v600, %v599
        %v602 = vrot.slane %v276, 1
        %v603 = vsel %vm303, %v602, %v601
        %v604 = vsel %vm306, %v278, %v603
        %605 = vrot.lane.b32.xlu0 %v604, 33
        %v606 = vpop.permute.xlu0 %605
        %vm608 = vcmask 400648
        %609 = vst.msk [vmem:[#allocation2 + $0x10] sm:$0xff] %vm608, %v606
        %v610 = vld [vmem:[#allocation2] sm:$0xff]
        %v611 = vld [vmem:[#allocation2 + $0x8] sm:$0xff]
        %v612 = vld [vmem:[#allocation2 + $0x10] sm:$0xff]
        %616 = vrot.lane.b32.xlu0 %v610, 127
        %v617 = vpop.permute.xlu0 %616
        %618 = vrot.lane.b32.xlu0 %v611, 127
        %v619 = vpop.permute.xlu0 %618
        %620 = vrot.lane.b32.xlu0 %v612, 127
        %v621 = vpop.permute.xlu0 %620
        %vm622 = vcmask 1039360
        %v623 = vsel %vm622, %v617, %v619
        %v624 = vsel %vm622, %v619, %v621
        %628 = vrot.lane.b32.xlu0 %v610, 126
        %v629 = vpop.permute.xlu0 %628
        %630 = vrot.lane.b32.xlu0 %v611, 126
        %v631 = vpop.permute.xlu0 %630
        %632 = vrot.lane.b32.xlu0 %v612, 126
        %v633 = vpop.permute.xlu0 %632
        %vm634 = vcmask 1031168
        %v635 = vsel %vm634, %v629, %v631
        %v636 = vsel %vm634, %v631, %v633
        %640 = vrot.lane.b32.xlu0 %v610, 110
        %v641 = vpop.permute.xlu0 %640
        %642 = vrot.lane.b32.xlu0 %v611, 110
        %v643 = vpop.permute.xlu0 %642
        %644 = vrot.lane.b32.xlu0 %v612, 110
        %v645 = vpop.permute.xlu0 %644
        %vm646 = vcmask 900096
        %v647 = vsel %vm646, %v641, %v643
        %v648 = vsel %vm646, %v643, %v645
        %652 = vrot.lane.b32.xlu0 %v610, 109
        %v653 = vpop.permute.xlu0 %652
        %654 = vrot.lane.b32.xlu0 %v611, 109
        %v655 = vpop.permute.xlu0 %654
        %656 = vrot.lane.b32.xlu0 %v612, 109
        %v657 = vpop.permute.xlu0 %656
        %vm658 = vcmask 891904
        %v659 = vsel %vm658, %v653, %v655
        %v660 = vsel %vm658, %v655, %v657
        %664 = vrot.lane.b32.xlu0 %v610, 108
        %v665 = vpop.permute.xlu0 %664
        %666 = vrot.lane.b32.xlu0 %v611, 108
        %v667 = vpop.permute.xlu0 %666
        %668 = vrot.lane.b32.xlu0 %v612, 108
        %v669 = vpop.permute.xlu0 %668
        %vm670 = vcmask 883712
        %v671 = vsel %vm670, %v665, %v667
        %v672 = vsel %vm670, %v667, %v669
        %676 = vrot.lane.b32.xlu0 %v610, 92
        %v677 = vpop.permute.xlu0 %676
        %678 = vrot.lane.b32.xlu0 %v611, 92
        %v679 = vpop.permute.xlu0 %678
        %680 = vrot.lane.b32.xlu0 %v612, 92
        %v681 = vpop.permute.xlu0 %680
        %vm682 = vcmask 752640
        %v683 = vsel %vm682, %v677, %v679
        %v684 = vsel %vm682, %v679, %v681
        %688 = vrot.lane.b32.xlu0 %v610, 91
        %v689 = vpop.permute.xlu0 %688
        %690 = vrot.lane.b32.xlu0 %v611, 91
        %v691 = vpop.permute.xlu0 %690
        %692 = vrot.lane.b32.xlu0 %v612, 91
        %v693 = vpop.permute.xlu0 %692
        %vm694 = vcmask 744448
        %v695 = vsel %vm694, %v689, %v691
        %v696 = vsel %vm694, %v691, %v693
        %700 = vrot.lane.b32.xlu0 %v610, 90
        %v701 = vpop.permute.xlu0 %700
        %702 = vrot.lane.b32.xlu0 %v611, 90
        %v703 = vpop.permute.xlu0 %702
        %704 = vrot.lane.b32.xlu0 %v612, 90
        %v705 = vpop.permute.xlu0 %704
        %vm706 = vcmask 736256
        %v707 = vsel %vm706, %v701, %v703
        %v708 = vsel %vm706, %v703, %v705
        %v712 = vld [vmem:[%s1] sm:$0xff]
        %v713 = vld [vmem:[%s1 + $0x8] sm:$0xff]
        %v714 = vld [vmem:[%s1 + $0x10] sm:$0xff]
        %v715 = vld [vmem:[%s1 + $0x18] sm:$0xff]
        %v716 = vld [vmem:[%s2] sm:$0xff]
        %v717 = vld [vmem:[%s2 + $0x8] sm:$0xff]
        %v718 = vld [vmem:[%s2 + $0x10] sm:$0xff]
        %v719 = vld [vmem:[%s2 + $0x18] sm:$0xff]
        %721 = vset.pattern.permute.xlu0 0
        %722 = vperm.xlu0 %721, %v716
        %v723 = vpop.permute.xlu0 %722
        %726 = vset.pattern.permute.xlu0 0
        %727 = vperm.xlu0 %726, %v717
        %v728 = vpop.permute.xlu0 %727
        %731 = vset.pattern.permute.xlu0 0
        %732 = vperm.xlu0 %731, %v718
        %v733 = vpop.permute.xlu0 %732
        %736 = vset.pattern.permute.xlu0 0
        %737 = vperm.xlu0 %736, %v719
        %v738 = vpop.permute.xlu0 %737
        %vm740 = vcmask 588800
        %v742 = vsel %vm740, %v712, 0
        %v745 = vsel %vm740, %v713, 0
        %v748 = vsel %vm740, %v714, 0
        %v751 = vsel %vm740, %v715, 0
        %753 = vmatpush.msra.mxu0 0.0
        %754 = vmatpush.msra.mxu0 0.0
        %755 = vmatpush.msra.mxu0 0.0
        %756 = vmatpush.msra.mxu0 0.0
        %757 = vmatpush.msra.mxu0 0.0
        %758 = vmatpush.msra.mxu0 0.0
        %759 = vmatpush.msra.mxu0 0.0
        %760 = vmatpush.msra.mxu0 %v707
        %761 = vmatpush.msra.mxu0 %v695
        %762 = vmatpush.msra.mxu0 %v683
        %763 = vmatpush.msra.mxu0 %v671
        %764 = vmatpush.msra.mxu0 %v659
        %765 = vmatpush.msra.mxu0 %v647
        %766 = vmatpush.msra.mxu0 %v635
        %767 = vmatpush.msra.mxu0 %v623
        %768 = vmatpush.msra.mxu0 %v610
        %769 = vmatmul.f32.gmra.mxu0 %v742
        %v770 = vpop.f32.mrf.mxu0
        %v771 = vadd.f32 %v723, %v770
        %772 = vmatmul.f32.gmra.mxu0 %v745
        %v773 = vpop.f32.mrf.mxu0
        %v774 = vadd.f32 %v728, %v773
        %775 = vmatmul.f32.gmra.mxu0 %v748
        %v776 = vpop.f32.mrf.mxu0
        %v777 = vadd.f32 %v733, %v776
        %778 = vmatmul.f32.gmra.mxu0 %v751
        %v779 = vpop.f32.mrf.mxu0
        %v780 = vadd.f32 %v738, %v779
        %781 = vdwg.mxu0
        %782 = vmatpush.msra.mxu0 0.0
        %783 = vmatpush.msra.mxu0 0.0
        %784 = vmatpush.msra.mxu0 0.0
        %785 = vmatpush.msra.mxu0 0.0
        %786 = vmatpush.msra.mxu0 0.0
        %787 = vmatpush.msra.mxu0 0.0
        %788 = vmatpush.msra.mxu0 0.0
        %789 = vmatpush.msra.mxu0 %v708
        %790 = vmatpush.msra.mxu0 %v696
        %791 = vmatpush.msra.mxu0 %v684
        %792 = vmatpush.msra.mxu0 %v672
        %793 = vmatpush.msra.mxu0 %v660
        %794 = vmatpush.msra.mxu0 %v648
        %795 = vmatpush.msra.mxu0 %v636
        %796 = vmatpush.msra.mxu0 %v624
        %797 = vmatpush.msra.mxu0 %v611
        %798 = vmatmul.f32.gmra.mxu0 %v742
        %v799 = vpop.f32.mrf.mxu0
        %v800 = vadd.f32 %v723, %v799
        %801 = vmatmul.f32.gmra.mxu0 %v745
        %v802 = vpop.f32.mrf.mxu0
        %v803 = vadd.f32 %v728, %v802
        %804 = vmatmul.f32.gmra.mxu0 %v748
        %v805 = vpop.f32.mrf.mxu0
        %v806 = vadd.f32 %v733, %v805
        %807 = vmatmul.f32.gmra.mxu0 %v751
        %v808 = vpop.f32.mrf.mxu0
        %v809 = vadd.f32 %v738, %v808
        %810 = vdwg.mxu0
        %811 = vmatpush.msra.mxu0 0.0
        %812 = vmatpush.msra.mxu0 0.0
        %813 = vmatpush.msra.mxu0 0.0
        %814 = vmatpush.msra.mxu0 0.0
        %815 = vmatpush.msra.mxu0 0.0
        %816 = vmatpush.msra.mxu0 0.0
        %817 = vmatpush.msra.mxu0 0.0
        %818 = vmatpush.msra.mxu0 %v705
        %819 = vmatpush.msra.mxu0 %v693
        %820 = vmatpush.msra.mxu0 %v681
        %821 = vmatpush.msra.mxu0 %v669
        %822 = vmatpush.msra.mxu0 %v657
        %823 = vmatpush.msra.mxu0 %v645
        %824 = vmatpush.msra.mxu0 %v633
        %825 = vmatpush.msra.mxu0 %v621
        %826 = vmatpush.msra.mxu0 %v612
        %827 = vmatmul.f32.gmra.mxu0 %v742
        %v828 = vpop.f32.mrf.mxu0
        %v829 = vadd.f32 %v723, %v828
        %830 = vmatmul.f32.gmra.mxu0 %v745
        %v831 = vpop.f32.mrf.mxu0
        %v832 = vadd.f32 %v728, %v831
        %833 = vmatmul.f32.gmra.mxu0 %v748
        %v834 = vpop.f32.mrf.mxu0
        %v835 = vadd.f32 %v733, %v834
        %836 = vmatmul.f32.gmra.mxu0 %v751
        %v837 = vpop.f32.mrf.mxu0
        %v838 = vadd.f32 %v738, %v837
        %839 = vdwg.mxu0
        %v840 = vmax.f32 %v771, 0.0
        %v841 = vmax.f32 %v800, 0.0
        %v842 = vmax.f32 %v829, 0.0
        %v843 = vmax.f32 %v774, 0.0
        %v844 = vmax.f32 %v803, 0.0
        %v845 = vmax.f32 %v832, 0.0
        %v846 = vmax.f32 %v777, 0.0
        %v847 = vmax.f32 %v806, 0.0
        %v848 = vmax.f32 %v835, 0.0
        %v849 = vmax.f32 %v780, 0.0
        %v850 = vmax.f32 %v809, 0.0
        %v851 = vmax.f32 %v838, 0.0
        %v852 = vlaneseq
        %v853 = vand.u32 %v852, 127
        %v854 = vadd.s32 %v853, 128
        %v855 = vadd.s32 %v853, 256
        %vm856 = vcmp.lt.s32.totalorder %v853, 0
        %v857 = vsub.s32 0, %v853
        %v858 = vsel %vm856, %v857, %v853
        %v859 = vand.u32 %v858, 65535
        %v860 = vshrl.u32 %v858, 16
        %v862 = vmul.u32 %v859, 14564
        %v863 = vmul.u32 %v859, 58254
        %v864 = vmul.u32 %v860, 14564
        %v865 = vmul.u32 %v860, 58254
        %v866 = vshll.u32 %v863, 16
        %v867 = vshrl.u32 %v863, 16
        %v868 = vshll.u32 %v864, 16
        %v869 = vshrl.u32 %v864, 16
        %vm870 = vc.u32 %v862, %v866
        %v871 = vsel %vm870, 1, 0
        %v872 = vadd.s32 %v862, %v866
        %v873 = vadd.s32 %v865, %v871
        %vm874 = vc.u32 %v872, %v868
        %v875 = vsel %vm874, 1, 0
        %v876 = vadd.s32 %v872, %v868
        %v877 = vadd.s32 %v873, %v875
        %v878 = vadd.s32 %v877, %v867
        %v879 = vadd.s32 %v878, %v869
        %v880 = vshrl.u32 %v879, 4
        %v881 = vmul.u32 %v880, 18
        %v882 = vsub.s32 %v858, %v881
        %v883 = vsub.s32 0, %v882
        %v884 = vsel %vm856, %v883, %v882
        %vm885 = vcmp.lt.s32.totalorder %v854, 0
        %v886 = vsub.s32 0, %v854
        %v887 = vsel %vm885, %v886, %v854
        %v888 = vand.u32 %v887, 65535
        %v889 = vshrl.u32 %v887, 16
        %v891 = vmul.u32 %v888, 14564
        %v892 = vmul.u32 %v888, 58254
        %v893 = vmul.u32 %v889, 14564
        %v894 = vmul.u32 %v889, 58254
        %v895 = vshll.u32 %v892, 16
        %v896 = vshrl.u32 %v892, 16
        %v897 = vshll.u32 %v893, 16
        %v898 = vshrl.u32 %v893, 16
        %vm899 = vc.u32 %v891, %v895
        %v900 = vsel %vm899, 1, 0
        %v901 = vadd.s32 %v891, %v895
        %v902 = vadd.s32 %v894, %v900
        %vm903 = vc.u32 %v901, %v897
        %v904 = vsel %vm903, 1, 0
        %v905 = vadd.s32 %v901, %v897
        %v906 = vadd.s32 %v902, %v904
        %v907 = vadd.s32 %v906, %v896
        %v908 = vadd.s32 %v907, %v898
        %v909 = vshrl.u32 %v908, 4
        %v910 = vmul.u32 %v909, 18
        %v911 = vsub.s32 %v887, %v910
        %v912 = vsub.s32 0, %v911
        %v913 = vsel %vm885, %v912, %v911
        %vm914 = vcmp.lt.s32.totalorder %v855, 0
        %v915 = vsub.s32 0, %v855
        %v916 = vsel %vm914, %v915, %v855
        %v917 = vand.u32 %v916, 65535
        %v918 = vshrl.u32 %v916, 16
        %v920 = vmul.u32 %v917, 14564
        %v921 = vmul.u32 %v917, 58254
        %v922 = vmul.u32 %v918, 14564
        %v923 = vmul.u32 %v918, 58254
        %v924 = vshll.u32 %v921, 16
        %v925 = vshrl.u32 %v921, 16
        %v926 = vshll.u32 %v922, 16
        %v927 = vshrl.u32 %v922, 16
        %vm928 = vc.u32 %v920, %v924
        %v929 = vsel %vm928, 1, 0
        %v930 = vadd.s32 %v920, %v924
        %v931 = vadd.s32 %v923, %v929
        %vm932 = vc.u32 %v930, %v926
        %v933 = vsel %vm932, 1, 0
        %v934 = vadd.s32 %v930, %v926
        %v935 = vadd.s32 %v931, %v933
        %v936 = vadd.s32 %v935, %v925
        %v937 = vadd.s32 %v936, %v927
        %v938 = vshrl.u32 %v937, 4
        %v939 = vmul.u32 %v938, 18
        %v940 = vsub.s32 %v916, %v939
        %v941 = vsub.s32 0, %v940
        %v942 = vsel %vm914, %v941, %v940
        %vm943 = vcmp.ne.s32.totalorder %v884, 0
        %vm944 = vcmp.ne.s32.totalorder %v913, 0
        %vm945 = vcmp.ne.s32.totalorder %v942, 0
        %vm946 = vcmp.lt.s32.totalorder %v884, 0
        %vm947 = vcmp.lt.s32.totalorder %v913, 0
        %vm948 = vcmp.lt.s32.totalorder %v942, 0
        %vm949 = vmand %vm946, %vm943
        %vm950 = vmand %vm947, %vm944
        %vm951 = vmand %vm948, %vm945
        %v952 = vadd.s32 %v884, 18
        %v953 = vadd.s32 %v913, 18
        %v954 = vadd.s32 %v942, 18
        %v955 = vsel %vm949, %v952, %v884
        %v956 = vsel %vm950, %v953, %v913
        %v957 = vsel %vm951, %v954, %v942
        %vm958 = vcmp.lt.s32.totalorder %v955, 16
        %vm959 = vcmp.lt.s32.totalorder %v956, 16
        %vm960 = vcmp.lt.s32.totalorder %v957, 16
        %v961 = vsel %vm958, 1, 0
        %v962 = vsel %vm959, 1, 0
        %v963 = vsel %vm960, 1, 0
        %vm964 = vcmp.eq.s32.totalorder %v961, 1
        %vm965 = vcmp.eq.s32.totalorder %v962, 1
        %vm966 = vcmp.eq.s32.totalorder %v963, 1
        %v967 = vsel %vm964, %v840, 0.0
        %v968 = vsel %vm965, %v841, 0.0
        %v969 = vsel %vm966, %v842, 0.0
        %v970 = vsel %vm964, %v843, 0.0
        %v971 = vsel %vm965, %v844, 0.0
        %v972 = vsel %vm966, %v845, 0.0
        %v973 = vsel %vm964, %v846, 0.0
        %v974 = vsel %vm965, %v847, 0.0
        %v975 = vsel %vm966, %v848, 0.0
        %v976 = vsel %vm964, %v849, 0.0
        %v977 = vsel %vm965, %v850, 0.0
        %v978 = vsel %vm966, %v851, 0.0
        %991 = vrot.lane.b32.xlu0 %v967, 19
        %v992 = vpop.permute.xlu0 %991
        %993 = vrot.lane.b32.xlu0 %v968, 19
        %v994 = vpop.permute.xlu0 %993
        %995 = vrot.lane.b32.xlu0 %v969, 19
        %v996 = vpop.permute.xlu0 %995
        %997 = vrot.lane.b32.xlu0 %v970, 19
        %v998 = vpop.permute.xlu0 %997
        %999 = vrot.lane.b32.xlu0 %v971, 19
        %v1000 = vpop.permute.xlu0 %999
        %1001 = vrot.lane.b32.xlu0 %v972, 19
        %v1002 = vpop.permute.xlu0 %1001
        %1003 = vrot.lane.b32.xlu0 %v973, 19
        %v1004 = vpop.permute.xlu0 %1003
        %1005 = vrot.lane.b32.xlu0 %v974, 19
        %v1006 = vpop.permute.xlu0 %1005
        %1007 = vrot.lane.b32.xlu0 %v975, 19
        %v1008 = vpop.permute.xlu0 %1007
        %1009 = vrot.lane.b32.xlu0 %v976, 19
        %v1010 = vpop.permute.xlu0 %1009
        %1011 = vrot.lane.b32.xlu0 %v977, 19
        %v1012 = vpop.permute.xlu0 %1011
        %1013 = vrot.lane.b32.xlu0 %v978, 19
        %v1014 = vpop.permute.xlu0 %1013
        %vm1015 = vcmask 154624
        %v1016 = vsel %vm1015, %v992, %v994
        %v1017 = vsel %vm1015, %v994, %v996
        %v1018 = vsel %vm1015, %v998, %v1000
        %v1019 = vsel %vm1015, %v1000, %v1002
        %v1020 = vsel %vm1015, %v1004, %v1006
        %v1021 = vsel %vm1015, %v1006, %v1008
        %v1022 = vsel %vm1015, %v1010, %v1012
        %v1023 = vsel %vm1015, %v1012, %v1014
        %vm1036 = vcmask 1047704
        %1037 = vst.msk [vmem:[#allocation3] sm:$0xff] %vm1036, %v992
        %1038 = vst [vmem:[#allocation3 + $0x8] sm:$0xff] %v1016
        %vm1039 = vcmask 416768
        %1040 = vst.msk [vmem:[#allocation3 + $0x10] sm:$0xff] %vm1039, %v1017
        %1041 = vst.msk [vmem:[#allocation3 + $0x18] sm:$0xff] %vm1036, %v998
        %1042 = vst [vmem:[#allocation3 + $0x20] sm:$0xff] %v1018
        %1043 = vst.msk [vmem:[#allocation3 + $0x28] sm:$0xff] %vm1039, %v1019
        %1044 = vst.msk [vmem:[#allocation3 + $0x30] sm:$0xff] %vm1036, %v1004
        %1045 = vst [vmem:[#allocation3 + $0x38] sm:$0xff] %v1020
        %1046 = vst.msk [vmem:[#allocation3 + $0x40] sm:$0xff] %vm1039, %v1021
        %1047 = vst.msk [vmem:[#allocation3 + $0x48] sm:$0xff] %vm1036, %v1010
        %1048 = vst [vmem:[#allocation3 + $0x50] sm:$0xff] %v1022
        %1049 = vst.msk [vmem:[#allocation3 + $0x58] sm:$0xff] %vm1039, %v1023
        %v1050 = vld [vmem:[#allocation3] sm:$0xff]
        %v1051 = vld [vmem:[#allocation3 + $0x8] sm:$0xff]
        %v1052 = vld [vmem:[#allocation3 + $0x10] sm:$0xff]
        %v1053 = vld [vmem:[#allocation3 + $0x18] sm:$0xff]
        %v1054 = vld [vmem:[#allocation3 + $0x20] sm:$0xff]
        %v1055 = vld [vmem:[#allocation3 + $0x28] sm:$0xff]
        %v1056 = vld [vmem:[#allocation3 + $0x30] sm:$0xff]
        %v1057 = vld [vmem:[#allocation3 + $0x38] sm:$0xff]
        %v1058 = vld [vmem:[#allocation3 + $0x40] sm:$0xff]
        %v1059 = vld [vmem:[#allocation3 + $0x48] sm:$0xff]
        %v1060 = vld [vmem:[#allocation3 + $0x50] sm:$0xff]
        %v1061 = vld [vmem:[#allocation3 + $0x58] sm:$0xff]
        %1074 = vrot.lane.b32.xlu0 %v1050, 127
        %v1075 = vpop.permute.xlu0 %1074
        %1076 = vrot.lane.b32.xlu0 %v1051, 127
        %v1077 = vpop.permute.xlu0 %1076
        %1078 = vrot.lane.b32.xlu0 %v1052, 127
        %v1079 = vpop.permute.xlu0 %1078
        %1080 = vrot.lane.b32.xlu0 %v1053, 127
        %v1081 = vpop.permute.xlu0 %1080
        %1082 = vrot.lane.b32.xlu0 %v1054, 127
        %v1083 = vpop.permute.xlu0 %1082
        %1084 = vrot.lane.b32.xlu0 %v1055, 127
        %v1085 = vpop.permute.xlu0 %1084
        %1086 = vrot.lane.b32.xlu0 %v1056, 127
        %v1087 = vpop.permute.xlu0 %1086
        %1088 = vrot.lane.b32.xlu0 %v1057, 127
        %v1089 = vpop.permute.xlu0 %1088
        %1090 = vrot.lane.b32.xlu0 %v1058, 127
        %v1091 = vpop.permute.xlu0 %1090
        %1092 = vrot.lane.b32.xlu0 %v1059, 127
        %v1093 = vpop.permute.xlu0 %1092
        %1094 = vrot.lane.b32.xlu0 %v1060, 127
        %v1095 = vpop.permute.xlu0 %1094
        %1096 = vrot.lane.b32.xlu0 %v1061, 127
        %v1097 = vpop.permute.xlu0 %1096
        %v1098 = vsel %vm622, %v1075, %v1077
        %v1099 = vsel %vm622, %v1077, %v1079
        %v1100 = vsel %vm622, %v1081, %v1083
        %v1101 = vsel %vm622, %v1083, %v1085
        %v1102 = vsel %vm622, %v1087, %v1089
        %v1103 = vsel %vm622, %v1089, %v1091
        %v1104 = vsel %vm622, %v1093, %v1095
        %v1105 = vsel %vm622, %v1095, %v1097
        %1118 = vrot.lane.b32.xlu0 %v1050, 126
        %v1119 = vpop.permute.xlu0 %1118
        %1120 = vrot.lane.b32.xlu0 %v1051, 126
        %v1121 = vpop.permute.xlu0 %1120
        %1122 = vrot.lane.b32.xlu0 %v1052, 126
        %v1123 = vpop.permute.xlu0 %1122
        %1124 = vrot.lane.b32.xlu0 %v1053, 126
        %v1125 = vpop.permute.xlu0 %1124
        %1126 = vrot.lane.b32.xlu0 %v1054, 126
        %v1127 = vpop.permute.xlu0 %1126
        %1128 = vrot.lane.b32.xlu0 %v1055, 126
        %v1129 = vpop.permute.xlu0 %1128
        %1130 = vrot.lane.b32.xlu0 %v1056, 126
        %v1131 = vpop.permute.xlu0 %1130
        %1132 = vrot.lane.b32.xlu0 %v1057, 126
        %v1133 = vpop.permute.xlu0 %1132
        %1134 = vrot.lane.b32.xlu0 %v1058, 126
        %v1135 = vpop.permute.xlu0 %1134
        %1136 = vrot.lane.b32.xlu0 %v1059, 126
        %v1137 = vpop.permute.xlu0 %1136
        %1138 = vrot.lane.b32.xlu0 %v1060, 126
        %v1139 = vpop.permute.xlu0 %1138
        %1140 = vrot.lane.b32.xlu0 %v1061, 126
        %v1141 = vpop.permute.xlu0 %1140
        %v1142 = vsel %vm634, %v1119, %v1121
        %v1143 = vsel %vm634, %v1121, %v1123
        %v1144 = vsel %vm634, %v1125, %v1127
        %v1145 = vsel %vm634, %v1127, %v1129
        %v1146 = vsel %vm634, %v1131, %v1133
        %v1147 = vsel %vm634, %v1133, %v1135
        %v1148 = vsel %vm634, %v1137, %v1139
        %v1149 = vsel %vm634, %v1139, %v1141
        %1162 = vrot.lane.b32.xlu0 %v1050, 110
        %v1163 = vpop.permute.xlu0 %1162
        %1164 = vrot.lane.b32.xlu0 %v1051, 110
        %v1165 = vpop.permute.xlu0 %1164
        %1166 = vrot.lane.b32.xlu0 %v1052, 110
        %v1167 = vpop.permute.xlu0 %1166
        %1168 = vrot.lane.b32.xlu0 %v1053, 110
        %v1169 = vpop.permute.xlu0 %1168
        %1170 = vrot.lane.b32.xlu0 %v1054, 110
        %v1171 = vpop.permute.xlu0 %1170
        %1172 = vrot.lane.b32.xlu0 %v1055, 110
        %v1173 = vpop.permute.xlu0 %1172
        %1174 = vrot.lane.b32.xlu0 %v1056, 110
        %v1175 = vpop.permute.xlu0 %1174
        %1176 = vrot.lane.b32.xlu0 %v1057, 110
        %v1177 = vpop.permute.xlu0 %1176
        %1178 = vrot.lane.b32.xlu0 %v1058, 110
        %v1179 = vpop.permute.xlu0 %1178
        %1180 = vrot.lane.b32.xlu0 %v1059, 110
        %v1181 = vpop.permute.xlu0 %1180
        %1182 = vrot.lane.b32.xlu0 %v1060, 110
        %v1183 = vpop.permute.xlu0 %1182
        %1184 = vrot.lane.b32.xlu0 %v1061, 110
        %v1185 = vpop.permute.xlu0 %1184
        %v1186 = vsel %vm646, %v1163, %v1165
        %v1187 = vsel %vm646, %v1165, %v1167
        %v1188 = vsel %vm646, %v1169, %v1171
        %v1189 = vsel %vm646, %v1171, %v1173
        %v1190 = vsel %vm646, %v1175, %v1177
        %v1191 = vsel %vm646, %v1177, %v1179
        %v1192 = vsel %vm646, %v1181, %v1183
        %v1193 = vsel %vm646, %v1183, %v1185
        %1206 = vrot.lane.b32.xlu0 %v1050, 109
        %v1207 = vpop.permute.xlu0 %1206
        %1208 = vrot.lane.b32.xlu0 %v1051, 109
        %v1209 = vpop.permute.xlu0 %1208
        %1210 = vrot.lane.b32.xlu0 %v1052, 109
        %v1211 = vpop.permute.xlu0 %1210
        %1212 = vrot.lane.b32.xlu0 %v1053, 109
        %v1213 = vpop.permute.xlu0 %1212
        %1214 = vrot.lane.b32.xlu0 %v1054, 109
        %v1215 = vpop.permute.xlu0 %1214
        %1216 = vrot.lane.b32.xlu0 %v1055, 109
        %v1217 = vpop.permute.xlu0 %1216
        %1218 = vrot.lane.b32.xlu0 %v1056, 109
        %v1219 = vpop.permute.xlu0 %1218
        %1220 = vrot.lane.b32.xlu0 %v1057, 109
        %v1221 = vpop.permute.xlu0 %1220
        %1222 = vrot.lane.b32.xlu0 %v1058, 109
        %v1223 = vpop.permute.xlu0 %1222
        %1224 = vrot.lane.b32.xlu0 %v1059, 109
        %v1225 = vpop.permute.xlu0 %1224
        %1226 = vrot.lane.b32.xlu0 %v1060, 109
        %v1227 = vpop.permute.xlu0 %1226
        %1228 = vrot.lane.b32.xlu0 %v1061, 109
        %v1229 = vpop.permute.xlu0 %1228
        %v1230 = vsel %vm658, %v1207, %v1209
        %v1231 = vsel %vm658, %v1209, %v1211
        %v1232 = vsel %vm658, %v1213, %v1215
        %v1233 = vsel %vm658, %v1215, %v1217
        %v1234 = vsel %vm658, %v1219, %v1221
        %v1235 = vsel %vm658, %v1221, %v1223
        %v1236 = vsel %vm658, %v1225, %v1227
        %v1237 = vsel %vm658, %v1227, %v1229
        %1250 = vrot.lane.b32.xlu0 %v1050, 108
        %v1251 = vpop.permute.xlu0 %1250
        %1252 = vrot.lane.b32.xlu0 %v1051, 108
        %v1253 = vpop.permute.xlu0 %1252
        %1254 = vrot.lane.b32.xlu0 %v1052, 108
        %v1255 = vpop.permute.xlu0 %1254
        %1256 = vrot.lane.b32.xlu0 %v1053, 108
        %v1257 = vpop.permute.xlu0 %1256
        %1258 = vrot.lane.b32.xlu0 %v1054, 108
        %v1259 = vpop.permute.xlu0 %1258
        %1260 = vrot.lane.b32.xlu0 %v1055, 108
        %v1261 = vpop.permute.xlu0 %1260
        %1262 = vrot.lane.b32.xlu0 %v1056, 108
        %v1263 = vpop.permute.xlu0 %1262
        %1264 = vrot.lane.b32.xlu0 %v1057, 108
        %v1265 = vpop.permute.xlu0 %1264
        %1266 = vrot.lane.b32.xlu0 %v1058, 108
        %v1267 = vpop.permute.xlu0 %1266
        %1268 = vrot.lane.b32.xlu0 %v1059, 108
        %v1269 = vpop.permute.xlu0 %1268
        %1270 = vrot.lane.b32.xlu0 %v1060, 108
        %v1271 = vpop.permute.xlu0 %1270
        %1272 = vrot.lane.b32.xlu0 %v1061, 108
        %v1273 = vpop.permute.xlu0 %1272
        %v1274 = vsel %vm670, %v1251, %v1253
        %v1275 = vsel %vm670, %v1253, %v1255
        %v1276 = vsel %vm670, %v1257, %v1259
        %v1277 = vsel %vm670, %v1259, %v1261
        %v1278 = vsel %vm670, %v1263, %v1265
        %v1279 = vsel %vm670, %v1265, %v1267
        %v1280 = vsel %vm670, %v1269, %v1271
        %v1281 = vsel %vm670, %v1271, %v1273
        %1294 = vrot.lane.b32.xlu0 %v1050, 92
        %v1295 = vpop.permute.xlu0 %1294
        %1296 = vrot.lane.b32.xlu0 %v1051, 92
        %v1297 = vpop.permute.xlu0 %1296
        %1298 = vrot.lane.b32.xlu0 %v1052, 92
        %v1299 = vpop.permute.xlu0 %1298
        %1300 = vrot.lane.b32.xlu0 %v1053, 92
        %v1301 = vpop.permute.xlu0 %1300
        %1302 = vrot.lane.b32.xlu0 %v1054, 92
        %v1303 = vpop.permute.xlu0 %1302
        %1304 = vrot.lane.b32.xlu0 %v1055, 92
        %v1305 = vpop.permute.xlu0 %1304
        %1306 = vrot.lane.b32.xlu0 %v1056, 92
        %v1307 = vpop.permute.xlu0 %1306
        %1308 = vrot.lane.b32.xlu0 %v1057, 92
        %v1309 = vpop.permute.xlu0 %1308
        %1310 = vrot.lane.b32.xlu0 %v1058, 92
        %v1311 = vpop.permute.xlu0 %1310
        %1312 = vrot.lane.b32.xlu0 %v1059, 92
        %v1313 = vpop.permute.xlu0 %1312
        %1314 = vrot.lane.b32.xlu0 %v1060, 92
        %v1315 = vpop.permute.xlu0 %1314
        %1316 = vrot.lane.b32.xlu0 %v1061, 92
        %v1317 = vpop.permute.xlu0 %1316
        %v1318 = vsel %vm682, %v1295, %v1297
        %v1319 = vsel %vm682, %v1297, %v1299
        %v1320 = vsel %vm682, %v1301, %v1303
        %v1321 = vsel %vm682, %v1303, %v1305
        %v1322 = vsel %vm682, %v1307, %v1309
        %v1323 = vsel %vm682, %v1309, %v1311
        %v1324 = vsel %vm682, %v1313, %v1315
        %v1325 = vsel %vm682, %v1315, %v1317
        %1338 = vrot.lane.b32.xlu0 %v1050, 91
        %v1339 = vpop.permute.xlu0 %1338
        %1340 = vrot.lane.b32.xlu0 %v1051, 91
        %v1341 = vpop.permute.xlu0 %1340
        %1342 = vrot.lane.b32.xlu0 %v1052, 91
        %v1343 = vpop.permute.xlu0 %1342
        %1344 = vrot.lane.b32.xlu0 %v1053, 91
        %v1345 = vpop.permute.xlu0 %1344
        %1346 = vrot.lane.b32.xlu0 %v1054, 91
        %v1347 = vpop.permute.xlu0 %1346
        %1348 = vrot.lane.b32.xlu0 %v1055, 91
        %v1349 = vpop.permute.xlu0 %1348
        %1350 = vrot.lane.b32.xlu0 %v1056, 91
        %v1351 = vpop.permute.xlu0 %1350
        %1352 = vrot.lane.b32.xlu0 %v1057, 91
        %v1353 = vpop.permute.xlu0 %1352
        %1354 = vrot.lane.b32.xlu0 %v1058, 91
        %v1355 = vpop.permute.xlu0 %1354
        %1356 = vrot.lane.b32.xlu0 %v1059, 91
        %v1357 = vpop.permute.xlu0 %1356
        %1358 = vrot.lane.b32.xlu0 %v1060, 91
        %v1359 = vpop.permute.xlu0 %1358
        %1360 = vrot.lane.b32.xlu0 %v1061, 91
        %v1361 = vpop.permute.xlu0 %1360
        %v1362 = vsel %vm694, %v1339, %v1341
        %v1363 = vsel %vm694, %v1341, %v1343
        %v1364 = vsel %vm694, %v1345, %v1347
        %v1365 = vsel %vm694, %v1347, %v1349
        %v1366 = vsel %vm694, %v1351, %v1353
        %v1367 = vsel %vm694, %v1353, %v1355
        %v1368 = vsel %vm694, %v1357, %v1359
        %v1369 = vsel %vm694, %v1359, %v1361
        %1382 = vrot.lane.b32.xlu0 %v1050, 90
        %v1383 = vpop.permute.xlu0 %1382
        %1384 = vrot.lane.b32.xlu0 %v1051, 90
        %v1385 = vpop.permute.xlu0 %1384
        %1386 = vrot.lane.b32.xlu0 %v1052, 90
        %v1387 = vpop.permute.xlu0 %1386
        %1388 = vrot.lane.b32.xlu0 %v1053, 90
        %v1389 = vpop.permute.xlu0 %1388
        %1390 = vrot.lane.b32.xlu0 %v1054, 90
        %v1391 = vpop.permute.xlu0 %1390
        %1392 = vrot.lane.b32.xlu0 %v1055, 90
        %v1393 = vpop.permute.xlu0 %1392
        %1394 = vrot.lane.b32.xlu0 %v1056, 90
        %v1395 = vpop.permute.xlu0 %1394
        %1396 = vrot.lane.b32.xlu0 %v1057, 90
        %v1397 = vpop.permute.xlu0 %1396
        %1398 = vrot.lane.b32.xlu0 %v1058, 90
        %v1399 = vpop.permute.xlu0 %1398
        %1400 = vrot.lane.b32.xlu0 %v1059, 90
        %v1401 = vpop.permute.xlu0 %1400
        %1402 = vrot.lane.b32.xlu0 %v1060, 90
        %v1403 = vpop.permute.xlu0 %1402
        %1404 = vrot.lane.b32.xlu0 %v1061, 90
        %v1405 = vpop.permute.xlu0 %1404
        %v1406 = vsel %vm706, %v1383, %v1385
        %v1407 = vsel %vm706, %v1385, %v1387
        %v1408 = vsel %vm706, %v1389, %v1391
        %v1409 = vsel %vm706, %v1391, %v1393
        %v1410 = vsel %vm706, %v1395, %v1397
        %v1411 = vsel %vm706, %v1397, %v1399
        %v1412 = vsel %vm706, %v1401, %v1403
        %v1413 = vsel %vm706, %v1403, %v1405
        %v1426 = vld [vmem:[%s3] sm:$0x77]
        %v1427 = vld [vmem:[%s3 + $0x8] sm:$0x7]
        %v1428 = vld [vmem:[%s4] sm:$0x7]
        %1430 = vset.pattern.permute.xlu0 0
        %1431 = vperm.xlu0 %1430, %v1428
        %v1432 = vpop.permute.xlu0 %1431
        %1436 = vst [vmem:[#allocation1] ss:$2 sm:$0xff] %v1426
        %s1437 = scalar_lea.vmem [#allocation1], 16
        %1438 = vst [vmem:[%s1437] ss:$2 sm:$0xff] %v1427
        %v1439 = vld.sshfl [vmem:[#allocation1] sm:$0xff pattern:$0x75316420]
        %v1440 = vld.sshfl [vmem:[#allocation1 + $0x8] sm:$0xff pattern:$0x75316420]
        %v1441 = vld.sshfl [vmem:[#allocation1 + $0x10] sm:$0xff pattern:$0x75316420]
        %vm1444 = vcmask 261120
        %v1445 = vsel %vm1444, %v1441, 0
        %1447 = vmatpush.msra.mxu0 %v1192
        %1448 = vmatpush.msra.mxu0 %v1190
        %1449 = vmatpush.msra.mxu0 %v1188
        %1450 = vmatpush.msra.mxu0 %v1186
        %1451 = vmatpush.msra.mxu0 %v1148
        %1452 = vmatpush.msra.mxu0 %v1146
        %1453 = vmatpush.msra.mxu0 %v1144
        %1454 = vmatpush.msra.mxu0 %v1142
        %1455 = vmatpush.msra.mxu0 %v1104
        %1456 = vmatpush.msra.mxu0 %v1102
        %1457 = vmatpush.msra.mxu0 %v1100
        %1458 = vmatpush.msra.mxu0 %v1098
        %1459 = vmatpush.msra.mxu0 %v1059
        %1460 = vmatpush.msra.mxu0 %v1056
        %1461 = vmatpush.msra.mxu0 %v1053
        %1462 = vmatpush.msra.mxu0 %v1050
        %1463 = vmatmul.f32.gmra.mxu0 %v1439
        %v1464 = vpop.f32.mrf.mxu0
        %v1465 = vadd.f32 %v1432, %v1464
        %1466 = vdwg.mxu0
        %1467 = vmatpush.msra.mxu0 %v1368
        %1468 = vmatpush.msra.mxu0 %v1366
        %1469 = vmatpush.msra.mxu0 %v1364
        %1470 = vmatpush.msra.mxu0 %v1362
        %1471 = vmatpush.msra.mxu0 %v1324
        %1472 = vmatpush.msra.mxu0 %v1322
        %1473 = vmatpush.msra.mxu0 %v1320
        %1474 = vmatpush.msra.mxu0 %v1318
        %1475 = vmatpush.msra.mxu0 %v1280
        %1476 = vmatpush.msra.mxu0 %v1278
        %1477 = vmatpush.msra.mxu0 %v1276
        %1478 = vmatpush.msra.mxu0 %v1274
        %1479 = vmatpush.msra.mxu0 %v1236
        %1480 = vmatpush.msra.mxu0 %v1234
        %1481 = vmatpush.msra.mxu0 %v1232
        %1482 = vmatpush.msra.mxu0 %v1230
        %1483 = vmatmul.f32.gmra.mxu0 %v1440
        %v1484 = vpop.f32.mrf.mxu0
        %v1485 = vadd.f32 %v1465, %v1484
        %1486 = vdwg.mxu0
        %1487 = vmatpush.msra.mxu0 0.0
        %1488 = vmatpush.msra.mxu0 0.0
        %1489 = vmatpush.msra.mxu0 0.0
        %1490 = vmatpush.msra.mxu0 0.0
        %1491 = vmatpush.msra.mxu0 0.0
        %1492 = vmatpush.msra.mxu0 0.0
        %1493 = vmatpush.msra.mxu0 0.0
        %1494 = vmatpush.msra.mxu0 0.0
        %1495 = vmatpush.msra.mxu0 0.0
        %1496 = vmatpush.msra.mxu0 0.0
        %1497 = vmatpush.msra.mxu0 0.0
        %1498 = vmatpush.msra.mxu0 0.0
        %1499 = vmatpush.msra.mxu0 %v1412
        %1500 = vmatpush.msra.mxu0 %v1410
        %1501 = vmatpush.msra.mxu0 %v1408
        %1502 = vmatpush.msra.mxu0 %v1406
        %1503 = vmatmul.f32.gmra.mxu0 %v1445
        %v1504 = vpop.f32.mrf.mxu0
        %v1505 = vadd.f32 %v1485, %v1504
        %1506 = vdwg.mxu0
        %1507 = vmatpush.msra.mxu0 %v1193
        %1508 = vmatpush.msra.mxu0 %v1191
        %1509 = vmatpush.msra.mxu0 %v1189
        %1510 = vmatpush.msra.mxu0 %v1187
        %1511 = vmatpush.msra.mxu0 %v1149
        %1512 = vmatpush.msra.mxu0 %v1147
        %1513 = vmatpush.msra.mxu0 %v1145
        %1514 = vmatpush.msra.mxu0 %v1143
        %1515 = vmatpush.msra.mxu0 %v1105
        %1516 = vmatpush.msra.mxu0 %v1103
        %1517 = vmatpush.msra.mxu0 %v1101
        %1518 = vmatpush.msra.mxu0 %v1099
        %1519 = vmatpush.msra.mxu0 %v1060
        %1520 = vmatpush.msra.mxu0 %v1057
        %1521 = vmatpush.msra.mxu0 %v1054
        %1522 = vmatpush.msra.mxu0 %v1051
        %1523 = vmatmul.f32.gmra.mxu0 %v1439
        %v1524 = vpop.f32.mrf.mxu0
        %v1525 = vadd.f32 %v1432, %v1524
        %1526 = vdwg.mxu0
        %1527 = vmatpush.msra.mxu0 %v1369
        %1528 = vmatpush.msra.mxu0 %v1367
        %1529 = vmatpush.msra.mxu0 %v1365
        %1530 = vmatpush.msra.mxu0 %v1363
        %1531 = vmatpush.msra.mxu0 %v1325
        %1532 = vmatpush.msra.mxu0 %v1323
        %1533 = vmatpush.msra.mxu0 %v1321
        %1534 = vmatpush.msra.mxu0 %v1319
        %1535 = vmatpush.msra.mxu0 %v1281
        %1536 = vmatpush.msra.mxu0 %v1279
        %1537 = vmatpush.msra.mxu0 %v1277
        %1538 = vmatpush.msra.mxu0 %v1275
        %1539 = vmatpush.msra.mxu0 %v1237
        %1540 = vmatpush.msra.mxu0 %v1235
        %1541 = vmatpush.msra.mxu0 %v1233
        %1542 = vmatpush.msra.mxu0 %v1231
        %1543 = vmatmul.f32.gmra.mxu0 %v1440
        %v1544 = vpop.f32.mrf.mxu0
        %v1545 = vadd.f32 %v1525, %v1544
        %1546 = vdwg.mxu0
        %1547 = vmatpush.msra.mxu0 0.0
        %1548 = vmatpush.msra.mxu0 0.0
        %1549 = vmatpush.msra.mxu0 0.0
        %1550 = vmatpush.msra.mxu0 0.0
        %1551 = vmatpush.msra.mxu0 0.0
        %1552 = vmatpush.msra.mxu0 0.0
        %1553 = vmatpush.msra.mxu0 0.0
        %1554 = vmatpush.msra.mxu0 0.0
        %1555 = vmatpush.msra.mxu0 0.0
        %1556 = vmatpush.msra.mxu0 0.0
        %1557 = vmatpush.msra.mxu0 0.0
        %1558 = vmatpush.msra.mxu0 0.0
        %1559 = vmatpush.msra.mxu0 %v1413
        %1560 = vmatpush.msra.mxu0 %v1411
        %1561 = vmatpush.msra.mxu0 %v1409
        %1562 = vmatpush.msra.mxu0 %v1407
        %1563 = vmatmul.f32.gmra.mxu0 %v1445
        %v1564 = vpop.f32.mrf.mxu0
        %v1565 = vadd.f32 %v1545, %v1564
        %1566 = vdwg.mxu0
        %1567 = vmatpush.msra.mxu0 %v1185
        %1568 = vmatpush.msra.mxu0 %v1179
        %1569 = vmatpush.msra.mxu0 %v1173
        %1570 = vmatpush.msra.mxu0 %v1167
        %1571 = vmatpush.msra.mxu0 %v1141
        %1572 = vmatpush.msra.mxu0 %v1135
        %1573 = vmatpush.msra.mxu0 %v1129
        %1574 = vmatpush.msra.mxu0 %v1123
        %1575 = vmatpush.msra.mxu0 %v1097
        %1576 = vmatpush.msra.mxu0 %v1091
        %1577 = vmatpush.msra.mxu0 %v1085
        %1578 = vmatpush.msra.mxu0 %v1079
        %1579 = vmatpush.msra.mxu0 %v1061
        %1580 = vmatpush.msra.mxu0 %v1058
        %1581 = vmatpush.msra.mxu0 %v1055
        %1582 = vmatpush.msra.mxu0 %v1052
        %1583 = vmatmul.f32.gmra.mxu0 %v1439
        %v1584 = vpop.f32.mrf.mxu0
        %v1585 = vadd.f32 %v1432, %v1584
        %1586 = vdwg.mxu0
        %1587 = vmatpush.msra.mxu0 %v1361
        %1588 = vmatpush.msra.mxu0 %v1355
        %1589 = vmatpush.msra.mxu0 %v1349
        %1590 = vmatpush.msra.mxu0 %v1343
        %1591 = vmatpush.msra.mxu0 %v1317
        %1592 = vmatpush.msra.mxu0 %v1311
        %1593 = vmatpush.msra.mxu0 %v1305
        %1594 = vmatpush.msra.mxu0 %v1299
        %1595 = vmatpush.msra.mxu0 %v1273
        %1596 = vmatpush.msra.mxu0 %v1267
        %1597 = vmatpush.msra.mxu0 %v1261
        %1598 = vmatpush.msra.mxu0 %v1255
        %1599 = vmatpush.msra.mxu0 %v1229
        %1600 = vmatpush.msra.mxu0 %v1223
        %1601 = vmatpush.msra.mxu0 %v1217
        %1602 = vmatpush.msra.mxu0 %v1211
        %1603 = vmatmul.f32.gmra.mxu0 %v1440
        %v1604 = vpop.f32.mrf.mxu0
        %v1605 = vadd.f32 %v1585, %v1604
        %1606 = vdwg.mxu0
        %1607 = vmatpush.msra.mxu0 0.0
        %1608 = vmatpush.msra.mxu0 0.0
        %1609 = vmatpush.msra.mxu0 0.0
        %1610 = vmatpush.msra.mxu0 0.0
        %1611 = vmatpush.msra.mxu0 0.0
        %1612 = vmatpush.msra.mxu0 0.0
        %1613 = vmatpush.msra.mxu0 0.0
        %1614 = vmatpush.msra.mxu0 0.0
        %1615 = vmatpush.msra.mxu0 0.0
        %1616 = vmatpush.msra.mxu0 0.0
        %1617 = vmatpush.msra.mxu0 0.0
        %1618 = vmatpush.msra.mxu0 0.0
        %1619 = vmatpush.msra.mxu0 %v1405
        %1620 = vmatpush.msra.mxu0 %v1399
        %1621 = vmatpush.msra.mxu0 %v1393
        %1622 = vmatpush.msra.mxu0 %v1387
        %1623 = vmatmul.f32.gmra.mxu0 %v1445
        %v1624 = vpop.f32.mrf.mxu0
        %v1625 = vadd.f32 %v1605, %v1624
        %1626 = vdwg.mxu0
        %vm1627 = vcmask 124928
        %1628 = vst.msk [vmem:[%s246] sm:$0x7] %vm1627, %v1505
        %1630 = vrot.lane.b32.xlu0 %v1505, 126
        %v1631 = vpop.permute.xlu0 %1630
        %vm1633 = vcmask 256128
        %1634 = vst.msk [vmem:[%s246] sm:$0x7] %vm1633, %v1631
        %1635 = vrot.lane.b32.xlu0 %v1505, 124
        %v1636 = vpop.permute.xlu0 %1635
        %vm1638 = vcmask 387328
        %1639 = vst.msk [vmem:[%s246] sm:$0x7] %vm1638, %v1636
        %1640 = vrot.lane.b32.xlu0 %v1505, 122
        %v1641 = vpop.permute.xlu0 %1640
        %vm1643 = vcmask 518528
        %1644 = vst.msk [vmem:[%s246] sm:$0x7] %vm1643, %v1641
        %1645 = vrot.lane.b32.xlu0 %v1505, 120
        %v1646 = vpop.permute.xlu0 %1645
        %vm1648 = vcmask 649728
        %1649 = vst.msk [vmem:[%s246] sm:$0x7] %vm1648, %v1646
        %1650 = vrot.lane.b32.xlu0 %v1505, 118
        %v1651 = vpop.permute.xlu0 %1650
        %vm1653 = vcmask 780928
        %1654 = vst.msk [vmem:[%s246] sm:$0x7] %vm1653, %v1651
        %1655 = vrot.lane.b32.xlu0 %v1505, 116
        %v1656 = vpop.permute.xlu0 %1655
        %vm1658 = vcmask 912128
        %1659 = vst.msk [vmem:[%s246] sm:$0x7] %vm1658, %v1656
        %v1661 = vrot.slane %v1565, 4
        %vm1662 = vcmask 1043456
        %v1663 = vsel %vm1662, %v1505, %v1661
        %1664 = vrot.lane.b32.xlu0 %v1663, 114
        %v1665 = vpop.permute.xlu0 %1664
        %v1666 = vrot.slane %v1665, 4
        %vm1667 = vcmask 932864
        %v1668 = vsel %vm1667, %v1665, %v1666
        %vm1670 = vcmask 1043328
        %1671 = vst.msk [vmem:[%s246] sm:$0x7] %vm1670, %v1668
        %1672 = vrot.lane.b32.xlu0 %v1565, 112
        %v1673 = vpop.permute.xlu0 %1672
        %1675 = vst.msk [vmem:[%s246 + $0x4] sm:$0x7] %vm1627, %v1673
        %1676 = vrot.lane.b32.xlu0 %v1565, 110
        %v1677 = vpop.permute.xlu0 %1676
        %1679 = vst.msk [vmem:[%s246 + $0x4] sm:$0x7] %vm1633, %v1677
        %1680 = vrot.lane.b32.xlu0 %v1565, 108
        %v1681 = vpop.permute.xlu0 %1680
        %1683 = vst.msk [vmem:[%s246 + $0x4] sm:$0x7] %vm1638, %v1681
        %1684 = vrot.lane.b32.xlu0 %v1565, 106
        %v1685 = vpop.permute.xlu0 %1684
        %1687 = vst.msk [vmem:[%s246 + $0x4] sm:$0x7] %vm1643, %v1685
        %1688 = vrot.lane.b32.xlu0 %v1565, 104
        %v1689 = vpop.permute.xlu0 %1688
        %1691 = vst.msk [vmem:[%s246 + $0x4] sm:$0x7] %vm1648, %v1689
        %1692 = vrot.lane.b32.xlu0 %v1565, 102
        %v1693 = vpop.permute.xlu0 %1692
        %1695 = vst.msk [vmem:[%s246 + $0x4] sm:$0x7] %vm1653, %v1693
        %v1697 = vrot.slane %v1625, 4
        %v1698 = vsel %vm1662, %v1565, %v1697
        %1699 = vrot.lane.b32.xlu0 %v1698, 100
        %v1700 = vpop.permute.xlu0 %1699
        %v1701 = vrot.slane %v1700, 4
        %vm1702 = vcmask 818176
        %v1703 = vsel %vm1702, %v1700, %v1701
        %1705 = vst.msk [vmem:[%s246 + $0x4] sm:$0x7] %vm1658, %v1703
        %1706 = vrot.lane.b32.xlu0 %v1625, 98
        %v1707 = vpop.permute.xlu0 %1706
        %1709 = vst.msk [vmem:[%s246 + $0x4] sm:$0x7] %vm1670, %v1707
        %p1710 = scmp.lt.s32.totalorder %s19, 1
        %s1711 = scalar_select %p1710, %s19, 1
        %s1712 = smul.addr %s1711, 2
        %s1713 = smul.addr %s1712, 4
        %s1714 = scalar_lea.vmem %s5, %s1713
        // Predicated region
        $region45: #{pred_head_forward.1} parent=39 // pred_check
          %p1715 = pneg %p147
        $region46: #{pred_head_forward.1} parent=39 // pred_check_branch
          %1717 = sbr.rel (%p1715) target = $region48
        $region47: #{pred_head_forward.1} parent=39 // pred_region
          _
        $region48: #{pred_head_forward.1} parent=39 // pred_fallthru
          _
      $region40: #{pred_head_forward.1} parent=5 // pred_fallthru
        _
      %p1718 = scmp.le.s32.totalorder 2, %s14
      // Predicated region
      $region49: #{pred_head_forward.1} parent=5 // pred_check
        %p1719 = pneg %p1718
      $region50: #{pred_head_forward.1} parent=5 // pred_check_branch
        %1721 = sbr.rel (%p1719) target = $region52
      $region51: #{pred_head_forward.1} parent=5 // pred_region
        %s1722 = ssub.s32 %s14, 2
        // Predicated region
        $region53: #{pred_head_forward.1} parent=51 // pred_check
          %p1723 = pneg %p153
        $region54: #{pred_head_forward.1} parent=51 // pred_check_branch
          %1725 = sbr.rel (%p1723) target = $region56
        $region55: #{pred_head_forward.1} parent=51 // pred_region
          %p1726 = scmp.lt.s32.totalorder %s20, 1
          %s1727 = scalar_select %p1726, %s20, 1
          %s1728 = smul.addr %s1727, 2
          %s1729 = smul.addr %s1728, 4
          %s1730 = scalar_lea.vmem %s5, %s1729
        $region56: #{pred_head_forward.1} parent=51 // pred_fallthru
          _
      $region52: #{pred_head_forward.1} parent=5 // pred_fallthru
        _
    $region6: #{pred_head_forward.1} parent=1 // loop_footer
      %s18 = sadd.s32 1, %s14
    $region7: #{pred_head_forward.1} parent=1 // loop_footer_branch
      %13 = sbr.rel target = $region3
    $region8: #{pred_head_forward.1} parent=1 // loop_exit
      _
    %1731 = vsyncpa [#allocation5], 1
    %s1732 = scalar_lea.sflag [#allocation5], 1
    %1733 = vsyncpa %s1732, 1

</llo_original>
